<compile_context>
chip_gen: v5e
topology: v5e:2x2
jax: 0.10.0
libtpu: 0.0.40
codegen_flags: <defaults>
</compile_context>

<pallas_src>
import jax
import jax.numpy as jnp
from jax.experimental import pallas as pl
from jax.experimental.pallas import tpu as pltpu

LANE = 128


def _round_up(n, m):
    return (n + m - 1) // m * m


def _leaky_relu(x, slope=0.2):
    return jnp.where(x > 0, x, slope * x)


def disc_kernel(x_ref, w1_ref, b1_ref, w2_ref, b2_ref, w3_ref, b3_ref, o_ref):
    # x_ref: (TILE_B, Dp) bf16; weights bf16 (padded, lane-dense); biases fp32.
    x = x_ref[...]

    # Layer 1: Linear(Dp -> 2Hp) + LeakyReLU(0.2), fp32 accumulation on MXU.
    h1 = jnp.dot(x, w1_ref[...], preferred_element_type=jnp.float32) + b1_ref[...]
    h1 = _leaky_relu(h1)
    # Dropout(0.3): identity in eval mode.

    # Layer 2: Linear(2Hp -> Hp) + LeakyReLU(0.2).
    h2 = jnp.dot(h1.astype(w2_ref.dtype), w2_ref[...],
                 preferred_element_type=jnp.float32) + b2_ref[...]
    h2 = _leaky_relu(h2)
    # Dropout(0.3): identity in eval mode.

    # Layer 3: Linear(Hp -> Op) + Sigmoid.  Output padded to 128 lanes for a
    # full-width MXU result and unmasked stores; only column 0 is meaningful.
    h3 = jnp.dot(h2.astype(w3_ref.dtype), w3_ref[...],
                 preferred_element_type=jnp.float32) + b3_ref[...]
    sig = pl.reciprocal(1.0 + jnp.exp(-h3), approx=True)   # exp + rcp on EUP
    o_ref[...] = sig.astype(o_ref.dtype)


def tabular_discriminator(x, padded_params, *, tile_b=512):
    """x: (B, input_dim) float32 -> (B, 1) float32 probabilities."""
    w1, b1, w2, b2, w3, b3 = padded_params
    B, D = x.shape
    Dp, H2p = w1.shape
    Hp = w2.shape[1]
    Op = w3.shape[1]

    tile_b = min(tile_b, _round_up(B, 8))       # sublane multiple of 8
    Bp = _round_up(B, tile_b)

    # Zero-pad batch and feature dims; cast activations to bf16.
    x_p = jnp.zeros((Bp, Dp), jnp.bfloat16).at[:B, :D].set(x.astype(jnp.bfloat16))

    grid = (Bp // tile_b,)

    out = pl.pallas_call(
        disc_kernel,
        out_shape=jax.ShapeDtypeStruct((Bp, Op), jnp.float32),
        grid=grid,
        in_specs=[
            pl.BlockSpec((tile_b, Dp), lambda i: (i, 0)),   # x tile, pipelined
            pl.BlockSpec((Dp, H2p), lambda i: (0, 0)),      # weights / biases:
            pl.BlockSpec((1, H2p), lambda i: (0, 0)),       # constant block
            pl.BlockSpec((H2p, Hp), lambda i: (0, 0)),      # index -> DMA'd
            pl.BlockSpec((1, Hp), lambda i: (0, 0)),        # once, VMEM-
            pl.BlockSpec((Hp, Op), lambda i: (0, 0)),       # resident.
            pl.BlockSpec((1, Op), lambda i: (0, 0)),
        ],
        out_specs=pl.BlockSpec((tile_b, Op), lambda i: (i, 0)),
        compiler_params=pltpu.CompilerParams(
            dimension_semantics=("parallel",),          # megacore sharding
            vmem_limit_bytes=32 * 1024 * 1024,          # safe on v5e/v6e/v7x
        ),
    )(x_p, w1, b1, w2, b2, w3, b3)

    return out[:B, :1]


def init_params(key, input_dim, hidden_dim):
    """PyTorch-style Linear init. Weights stored as (in, out), fp32."""
    ks = jax.random.split(key, 6)
    h2 = hidden_dim * 2

    def lin(kw, kb, fan_in, fan_out):
        bound = 1.0 / jnp.sqrt(jnp.float32(fan_in))
        w = jax.random.uniform(kw, (fan_in, fan_out), jnp.float32, -bound, bound)
        b = jax.random.uniform(kb, (1, fan_out), jnp.float32, -bound, bound)
        return w, b

    w1, b1 = lin(ks[0], ks[1], input_dim, h2)
    w2, b2 = lin(ks[2], ks[3], h2, hidden_dim)
    w3, b3 = lin(ks[4], ks[5], hidden_dim, 1)
    return (w1, b1, w2, b2, w3, b3)


def pad_params(params):
    """Zero-pad every feature dim to a multiple of 128; weights -> bf16."""
    w1, b1, w2, b2, w3, b3 = params

    def pad_w(w):
        i, o = w.shape
        ip, op = _round_up(i, LANE), _round_up(o, LANE)
        return jnp.zeros((ip, op), jnp.bfloat16).at[:i, :o].set(
            w.astype(jnp.bfloat16))

    def pad_b(b):
        o = b.shape[1]
        op = _round_up(o, LANE)
        return jnp.zeros((1, op), jnp.float32).at[:, :o].set(b)

    return (pad_w(w1), pad_b(b1), pad_w(w2), pad_b(b2), pad_w(w3), pad_b(b3))


if __name__ == "__main__":
    key = jax.random.PRNGKey(0)
    k_x, k_p = jax.random.split(key)

    batch, input_dim, hidden_dim = 1000, 16, 32   # small, not tile-aligned

    x = jax.random.normal(k_x, (batch, input_dim), jnp.float32)
    params = init_params(k_p, input_dim, hidden_dim)
    padded = pad_params(params)

    out = tabular_discriminator(x, padded)
    out = jax.block_until_ready(out)

    # Reference in plain JAX mirroring the kernel's bf16 operand rounding
    # (fp32 accumulation, eval-mode dropout, exact sigmoid).
    w1, b1, w2, b2, w3, b3 = params
    f32 = lambda a: a.astype(jnp.bfloat16).astype(jnp.float32)
    hp = jax.lax.Precision.HIGHEST
    r = _leaky_relu(jnp.dot(f32(x), f32(w1), precision=hp) + b1)
    r = _leaky_relu(jnp.dot(f32(r), f32(w2), precision=hp) + b2)
    ref = jax.nn.sigmoid(jnp.dot(f32(r), f32(w3), precision=hp) + b3)

    assert out.shape == (batch, 1)
    assert bool(jnp.all(jnp.isfinite(out)))
    # Tolerance accounts for bf16 operands + approx reciprocal in the sigmoid.
    assert jnp.allclose(out, ref, atol=1e-2, rtol=1e-2), (
        float(jnp.max(jnp.abs(out - ref))))

    print("KERNEL_OK")
</pallas_src>

<mosaic_0001>
module attributes {stable_mosaic.version = 11 : i64} {
  func.func @disc_kernel(%arg0: i32, %arg1: memref<512x128xbf16, #tpu.memory_space<vmem>>, %arg2: memref<128x128xbf16, #tpu.memory_space<vmem>>, %arg3: memref<1x128xf32, #tpu.memory_space<vmem>>, %arg4: memref<128x128xbf16, #tpu.memory_space<vmem>>, %arg5: memref<1x128xf32, #tpu.memory_space<vmem>>, %arg6: memref<128x128xbf16, #tpu.memory_space<vmem>>, %arg7: memref<1x128xf32, #tpu.memory_space<vmem>>, %arg8: memref<512x128xf32, #tpu.memory_space<vmem>>) attributes {dimension_semantics = [#tpu.dimension_semantics<parallel>], iteration_bounds = array<i64: 2>, scalar_prefetch = 0 : i64, scratch_operands = 0 : i64, tpu.core_type = #tpu.core_type<tc>, window_params = [{transform_indices = @transform_0, window_bounds = array<i64: 512, 128>}, {pipeline_mode = #tpu.pipeline_mode<synchronous>, transform_indices = @transform_1, window_bounds = array<i64: 128, 128>}, {pipeline_mode = #tpu.pipeline_mode<synchronous>, transform_indices = @transform_2, window_bounds = array<i64: 1, 128>}, {pipeline_mode = #tpu.pipeline_mode<synchronous>, transform_indices = @transform_3, window_bounds = array<i64: 128, 128>}, {pipeline_mode = #tpu.pipeline_mode<synchronous>, transform_indices = @transform_4, window_bounds = array<i64: 1, 128>}, {pipeline_mode = #tpu.pipeline_mode<synchronous>, transform_indices = @transform_5, window_bounds = array<i64: 128, 128>}, {pipeline_mode = #tpu.pipeline_mode<synchronous>, transform_indices = @transform_6, window_bounds = array<i64: 1, 128>}, {transform_indices = @transform_7, window_bounds = array<i64: 512, 128>}]} {
    %c0 = arith.constant 0 : index
    %c0_0 = arith.constant 0 : index
    %0 = vector.load %arg1[%c0, %c0_0] : memref<512x128xbf16, #tpu.memory_space<vmem>>, vector<512x128xbf16>
    %c0_1 = arith.constant 0 : index
    %c0_2 = arith.constant 0 : index
    %1 = vector.load %arg2[%c0_1, %c0_2] : memref<128x128xbf16, #tpu.memory_space<vmem>>, vector<128x128xbf16>
    %cst = arith.constant dense<0.000000e+00> : vector<512x128xf32>
    %2 = tpu.matmul %0, %1, %cst {dimension_numbers = #tpu.dot_dimension_numbers<[1], [0], [0], [1], [0, 0, 1, 1], [], []>} : vector<512x128xbf16>, vector<128x128xbf16>, vector<512x128xf32> -> vector<512x128xf32>
    %c0_3 = arith.constant 0 : index
    %c0_4 = arith.constant 0 : index
    %3 = vector.load %arg3[%c0_3, %c0_4] : memref<1x128xf32, #tpu.memory_space<vmem>>, vector<1x128xf32>
    %4 = vector.broadcast %3 : vector<1x128xf32> to vector<512x128xf32>
    %5 = arith.addf %2, %4 : vector<512x128xf32>
    %cst_5 = arith.constant 0.000000e+00 : f32
    %6 = vector.broadcast %cst_5 : f32 to vector<512x128xf32>
    %7 = arith.cmpf ogt, %5, %6 : vector<512x128xf32>
    %cst_6 = arith.constant 2.000000e-01 : f32
    %8 = vector.broadcast %cst_6 : f32 to vector<512x128xf32>
    %9 = arith.mulf %8, %5 : vector<512x128xf32>
    %10 = arith.select %7, %5, %9 : vector<512x128xi1>, vector<512x128xf32>
    %11 = arith.truncf %10 : vector<512x128xf32> to vector<512x128xbf16>
    %c0_7 = arith.constant 0 : index
    %c0_8 = arith.constant 0 : index
    %12 = vector.load %arg4[%c0_7, %c0_8] : memref<128x128xbf16, #tpu.memory_space<vmem>>, vector<128x128xbf16>
    %cst_9 = arith.constant dense<0.000000e+00> : vector<512x128xf32>
    %13 = tpu.matmul %11, %12, %cst_9 {dimension_numbers = #tpu.dot_dimension_numbers<[1], [0], [0], [1], [0, 0, 1, 1], [], []>} : vector<512x128xbf16>, vector<128x128xbf16>, vector<512x128xf32> -> vector<512x128xf32>
    %c0_10 = arith.constant 0 : index
    %c0_11 = arith.constant 0 : index
    %14 = vector.load %arg5[%c0_10, %c0_11] : memref<1x128xf32, #tpu.memory_space<vmem>>, vector<1x128xf32>
    %15 = vector.broadcast %14 : vector<1x128xf32> to vector<512x128xf32>
    %16 = arith.addf %13, %15 : vector<512x128xf32>
    %cst_12 = arith.constant 0.000000e+00 : f32
    %17 = vector.broadcast %cst_12 : f32 to vector<512x128xf32>
    %18 = arith.cmpf ogt, %16, %17 : vector<512x128xf32>
    %cst_13 = arith.constant 2.000000e-01 : f32
    %19 = vector.broadcast %cst_13 : f32 to vector<512x128xf32>
    %20 = arith.mulf %19, %16 : vector<512x128xf32>
    %21 = arith.select %18, %16, %20 : vector<512x128xi1>, vector<512x128xf32>
    %22 = arith.truncf %21 : vector<512x128xf32> to vector<512x128xbf16>
    %c0_14 = arith.constant 0 : index
    %c0_15 = arith.constant 0 : index
    %23 = vector.load %arg6[%c0_14, %c0_15] : memref<128x128xbf16, #tpu.memory_space<vmem>>, vector<128x128xbf16>
    %cst_16 = arith.constant dense<0.000000e+00> : vector<512x128xf32>
    %24 = tpu.matmul %22, %23, %cst_16 {dimension_numbers = #tpu.dot_dimension_numbers<[1], [0], [0], [1], [0, 0, 1, 1], [], []>} : vector<512x128xbf16>, vector<128x128xbf16>, vector<512x128xf32> -> vector<512x128xf32>
    %c0_17 = arith.constant 0 : index
    %c0_18 = arith.constant 0 : index
    %25 = vector.load %arg7[%c0_17, %c0_18] : memref<1x128xf32, #tpu.memory_space<vmem>>, vector<1x128xf32>
    %26 = vector.broadcast %25 : vector<1x128xf32> to vector<512x128xf32>
    %27 = arith.addf %24, %26 : vector<512x128xf32>
    %cst_19 = arith.constant 0.000000e+00 : f32
    %28 = vector.broadcast %cst_19 : f32 to vector<512x128xf32>
    %29 = arith.subf %28, %27 : vector<512x128xf32>
    %30 = math.exp %29 : vector<512x128xf32>
    %cst_20 = arith.constant 1.000000e+00 : f32
    %31 = vector.broadcast %cst_20 : f32 to vector<512x128xf32>
    %32 = arith.addf %31, %30 : vector<512x128xf32>
    %33 = tpu.reciprocal %32 {approx = true} : vector<512x128xf32> -> vector<512x128xf32>
    %c0_21 = arith.constant 0 : index
    %c0_22 = arith.constant 0 : index
    %34 = vector.load %arg8[%c0_21, %c0_22] : memref<512x128xf32, #tpu.memory_space<vmem>>, vector<512x128xf32>
    tpu.vector_store %arg8[%c0_21, %c0_22], %33 {strides = array<i32>} : memref<512x128xf32, #tpu.memory_space<vmem>>, vector<512x128xf32>,
    return
  }
  func.func @transform_0(%arg0: i32) -> (i32, i32) {
    %c0_i32 = arith.constant 0 : i32
    %c0_i32_0 = arith.constant 0 : i32
    return %arg0, %c0_i32 : i32, i32
  }
  func.func @transform_1(%arg0: i32) -> (i32, i32) {
    %c0_i32 = arith.constant 0 : i32
    %c0_i32_0 = arith.constant 0 : i32
    %c0_i32_1 = arith.constant 0 : i32
    return %c0_i32, %c0_i32_0 : i32, i32
  }
  func.func @transform_2(%arg0: i32) -> (i32, i32) {
    %c0_i32 = arith.constant 0 : i32
    %c0_i32_0 = arith.constant 0 : i32
    %c0_i32_1 = arith.constant 0 : i32
    return %c0_i32, %c0_i32_0 : i32, i32
  }
  func.func @transform_3(%arg0: i32) -> (i32, i32) {
    %c0_i32 = arith.constant 0 : i32
    %c0_i32_0 = arith.constant 0 : i32
    %c0_i32_1 = arith.constant 0 : i32
    return %c0_i32, %c0_i32_0 : i32, i32
  }
  func.func @transform_4(%arg0: i32) -> (i32, i32) {
    %c0_i32 = arith.constant 0 : i32
    %c0_i32_0 = arith.constant 0 : i32
    %c0_i32_1 = arith.constant 0 : i32
    return %c0_i32, %c0_i32_0 : i32, i32
  }
  func.func @transform_5(%arg0: i32) -> (i32, i32) {
    %c0_i32 = arith.constant 0 : i32
    %c0_i32_0 = arith.constant 0 : i32
    %c0_i32_1 = arith.constant 0 : i32
    return %c0_i32, %c0_i32_0 : i32, i32
  }
  func.func @transform_6(%arg0: i32) -> (i32, i32) {
    %c0_i32 = arith.constant 0 : i32
    %c0_i32_0 = arith.constant 0 : i32
    %c0_i32_1 = arith.constant 0 : i32
    return %c0_i32, %c0_i32_0 : i32, i32
  }
  func.func @transform_7(%arg0: i32) -> (i32, i32) {
    %c0_i32 = arith.constant 0 : i32
    %c0_i32_0 = arith.constant 0 : i32
    return %arg0, %c0_i32 : i32, i32
  }
}

</mosaic_0001>

<llo_original>
// kernel: tpu_custom_call.1
$region0: #{tpu_custom_call.1}
  #allocation0 [shape = 'u32[]', space=smem, size = 0x4, offset = 0x4, fixed_abs, tag = 'smem constant byte address 0x4 - core index']
  #allocation1 [shape = 'u32[72,128]{1,0:T(1,128)}', space=vmem, size = 0x9000, scoped, tag = 'internal scratch']
  %s0 = inlined_call_operand.hbm [shape: bf16[1024,128], index: 0, kind: input, shape index: {}]
  %s1 = inlined_call_operand.hbm [shape: bf16[128,128], index: 1, kind: input, shape index: {}]
  %s2 = inlined_call_operand.vmem [shape: f32[1,128], index: 2, kind: input, shape index: {}]
  %s3 = inlined_call_operand.hbm [shape: bf16[128,128], index: 3, kind: input, shape index: {}]
  %s4 = inlined_call_operand.vmem [shape: f32[1,128], index: 4, kind: input, shape index: {}]
  %s5 = inlined_call_operand.hbm [shape: bf16[128,128], index: 5, kind: input, shape index: {}]
  %s6 = inlined_call_operand.vmem [shape: f32[1,128], index: 6, kind: input, shape index: {}]
  %s7 = inlined_call_operand.hbm [shape: f32[1024,128], index: 7, kind: output, shape index: {}]
  %s8 = sld [smem:[#allocation0]]
  $region77: #{tpu_custom_call.1} parent=0
    _
  %s10 = ssub.s32 1, %s8
  %s11 = scalar_select 0, %s10, %s8
  $region1: #{tpu_custom_call.1} parent=0
    #allocation2 [shape = 'u8[262144]{0}', space=vmem, size = 0x40000, scoped, tag = 'input window, operand 0']
    #allocation3 [shape = 's32[2]{0}', space=sflag, size = 0x8, scoped, tag = 'scoped memory for tpu_custom_call.1']
    #allocation4 [shape = 's32[2]{0}', space=sflag, size = 0x8, scoped, tag = 'scoped memory for tpu_custom_call.1']
    #allocation5 [shape = 'u8[32768]{0}', space=vmem, size = 0x8000, scoped, tag = 'input window, operand 1, single buffered']
    #allocation6 [shape = 's32[1]{0}', space=sflag, size = 0x4, scoped, tag = 'scoped memory for tpu_custom_call.1']
    #allocation7 [shape = 'u8[32768]{0}', space=vmem, size = 0x8000, scoped, tag = 'input window, operand 3, single buffered']
    #allocation8 [shape = 'u8[32768]{0}', space=vmem, size = 0x8000, scoped, tag = 'input window, operand 5, single buffered']
    #allocation9 [shape = 's32[1]{0}', space=sflag, size = 0x4, scoped, tag = 'scoped memory for tpu_custom_call.1']
    #allocation10 [shape = 'u8[524288]{0}', space=vmem, size = 0x80000, scoped, tag = 'output window, operand 0']
    %12 = vsyncpa [#allocation3], 0
    %s13 = scalar_lea.sflag [#allocation3], 1
    %14 = vsyncpa %s13, 0
    %15 = vsyncpa [#allocation6], 0
    %16 = vsyncpa [#allocation9], 0
    %17 = vsyncpa [#allocation4], 0
    %s18 = scalar_lea.sflag [#allocation4], 1
    %19 = vsyncpa %s18, 0
    loop: start=0, step=1, limit=4
    $region2: #{tpu_custom_call.1} parent=1 // loop_pre_header
      _
    $region3: #{tpu_custom_call.1} parent=1 // loop_header
      %s21 = sphi 0, %s25
      %p22 = scmp.ge.s32.totalorder %s21, 4
      %s31 = sphi 0, %s33
      %s34 = sphi 0, %s31
      %s35 = sphi 0, %s34
      %s51 = sphi 0, %s35
      %s55 = sphi 0, %s55
      %s57 = sphi 0, %s55
      %s58 = sphi 0, %s57
      %s72 = sphi 0, %s58
      %s76 = sphi 0, %s76
      %s78 = sphi 0, %s76
      %s79 = sphi 0, %s78
      %s93 = sphi 0, %s79
      %s97 = sphi 0, %s97
      %s99 = sphi 0, %s97
      %s100 = sphi 0, %s99
      %s114 = sphi 0, %s100
      %s118 = sphi 0, %s118
      %s120 = sphi 0, %s118
      %s121 = sphi 0, %s120
      %s135 = sphi 0, %s121
      %s139 = sphi 0, %s139
      %s141 = sphi 0, %s139
      %s142 = sphi 0, %s141
      %s156 = sphi 0, %s142
      %s160 = sphi 0, %s160
      %s162 = sphi 0, %s160
      %s163 = sphi 0, %s162
      %s177 = sphi 0, %s163
      %s183 = sphi 0, %s185
      %s186 = sphi 0, %s183
      %s187 = sphi 0, %s186
      %s203 = sphi 0, %s187
    $region4: #{tpu_custom_call.1} parent=1 // loop_header_branch
      %24 = sbr.rel (%p22) target = $region8
    $region5: #{tpu_custom_call.1} parent=1 // loop_body
      %s26 = ssub.s32 %s21, 1
      %s27 = ssub.s32 %s21, 2
      %s28 = sadd.s32 %s21, 1
      %s29 = ssub.s32 %s21, %s28
      %p30 = scmp.eq.s32.totalorder %s29, 0
      %s32 = sadd.s32 %s31, 1
      %s33 = scalar_select %p30, %s31, %s32
      %p36 = pneg %p30
      %p37 = scmp.eq.s32.totalorder %s21, 1
      %p38 = por %p36, %p37
      %p39 = scmp.ne.s32.totalorder %s31, %s34
      %p40 = scmp.eq.s32.totalorder %s21, 0
      %p41 = por %p39, %p40
      %p42 = scmp.ne.s32.totalorder %s31, %s34
      %p43 = scmp.eq.s32.totalorder %s26, 1
      %p44 = por %p42, %p43
      %p45 = scmp.ne.s32.totalorder %s34, %s35
      %p46 = scmp.eq.s32.totalorder %s26, 0
      %p47 = por %p45, %p46
      %p48 = scmp.ne.s32.totalorder %s34, %s35
      %p49 = scmp.eq.s32.totalorder %s27, 1
      %p50 = por %p48, %p49
      %p52 = scmp.ne.s32.totalorder %s35, %s51
      %p53 = scmp.eq.s32.totalorder %s27, 0
      %p54 = por %p52, %p53
      %s56 = sadd.s32 %s55, 1
      %p59 = scmp.eq.s32.totalorder %s21, 1
      %p60 = scmp.ne.s32.totalorder %s55, %s57
      %p61 = scmp.eq.s32.totalorder %s21, 0
      %p62 = por %p60, %p61
      %p63 = scmp.ne.s32.totalorder %s55, %s57
      %p64 = scmp.eq.s32.totalorder %s26, 1
      %p65 = por %p63, %p64
      %p66 = scmp.ne.s32.totalorder %s57, %s58
      %p67 = scmp.eq.s32.totalorder %s26, 0
      %p68 = por %p66, %p67
      %p69 = scmp.ne.s32.totalorder %s57, %s58
      %p70 = scmp.eq.s32.totalorder %s27, 1
      %p71 = por %p69, %p70
      %p73 = scmp.ne.s32.totalorder %s58, %s72
      %p74 = scmp.eq.s32.totalorder %s27, 0
      %p75 = por %p73, %p74
      %s77 = sadd.s32 %s76, 1
      %p80 = scmp.eq.s32.totalorder %s21, 1
      %p81 = scmp.ne.s32.totalorder %s76, %s78
      %p82 = scmp.eq.s32.totalorder %s21, 0
      %p83 = por %p81, %p82
      %p84 = scmp.ne.s32.totalorder %s76, %s78
      %p85 = scmp.eq.s32.totalorder %s26, 1
      %p86 = por %p84, %p85
      %p87 = scmp.ne.s32.totalorder %s78, %s79
      %p88 = scmp.eq.s32.totalorder %s26, 0
      %p89 = por %p87, %p88
      %p90 = scmp.ne.s32.totalorder %s78, %s79
      %p91 = scmp.eq.s32.totalorder %s27, 1
      %p92 = por %p90, %p91
      %p94 = scmp.ne.s32.totalorder %s79, %s93
      %p95 = scmp.eq.s32.totalorder %s27, 0
      %p96 = por %p94, %p95
      %s98 = sadd.s32 %s97, 1
      %p101 = scmp.eq.s32.totalorder %s21, 1
      %p102 = scmp.ne.s32.totalorder %s97, %s99
      %p103 = scmp.eq.s32.totalorder %s21, 0
      %p104 = por %p102, %p103
      %p105 = scmp.ne.s32.totalorder %s97, %s99
      %p106 = scmp.eq.s32.totalorder %s26, 1
      %p107 = por %p105, %p106
      %p108 = scmp.ne.s32.totalorder %s99, %s100
      %p109 = scmp.eq.s32.totalorder %s26, 0
      %p110 = por %p108, %p109
      %p111 = scmp.ne.s32.totalorder %s99, %s100
      %p112 = scmp.eq.s32.totalorder %s27, 1
      %p113 = por %p111, %p112
      %p115 = scmp.ne.s32.totalorder %s100, %s114
      %p116 = scmp.eq.s32.totalorder %s27, 0
      %p117 = por %p115, %p116
      %s119 = sadd.s32 %s118, 1
      %p122 = scmp.eq.s32.totalorder %s21, 1
      %p123 = scmp.ne.s32.totalorder %s118, %s120
      %p124 = scmp.eq.s32.totalorder %s21, 0
      %p125 = por %p123, %p124
      %p126 = scmp.ne.s32.totalorder %s118, %s120
      %p127 = scmp.eq.s32.totalorder %s26, 1
      %p128 = por %p126, %p127
      %p129 = scmp.ne.s32.totalorder %s120, %s121
      %p130 = scmp.eq.s32.totalorder %s26, 0
      %p131 = por %p129, %p130
      %p132 = scmp.ne.s32.totalorder %s120, %s121
      %p133 = scmp.eq.s32.totalorder %s27, 1
      %p134 = por %p132, %p133
      %p136 = scmp.ne.s32.totalorder %s121, %s135
      %p137 = scmp.eq.s32.totalorder %s27, 0
      %p138 = por %p136, %p137
      %s140 = sadd.s32 %s139, 1
      %p143 = scmp.eq.s32.totalorder %s21, 1
      %p144 = scmp.ne.s32.totalorder %s139, %s141
      %p145 = scmp.eq.s32.totalorder %s21, 0
      %p146 = por %p144, %p145
      %p147 = scmp.ne.s32.totalorder %s139, %s141
      %p148 = scmp.eq.s32.totalorder %s26, 1
      %p149 = por %p147, %p148
      %p150 = scmp.ne.s32.totalorder %s141, %s142
      %p151 = scmp.eq.s32.totalorder %s26, 0
      %p152 = por %p150, %p151
      %p153 = scmp.ne.s32.totalorder %s141, %s142
      %p154 = scmp.eq.s32.totalorder %s27, 1
      %p155 = por %p153, %p154
      %p157 = scmp.ne.s32.totalorder %s142, %s156
      %p158 = scmp.eq.s32.totalorder %s27, 0
      %p159 = por %p157, %p158
      %s161 = sadd.s32 %s160, 1
      %p164 = scmp.eq.s32.totalorder %s21, 1
      %p165 = scmp.ne.s32.totalorder %s160, %s162
      %p166 = scmp.eq.s32.totalorder %s21, 0
      %p167 = por %p165, %p166
      %p168 = scmp.ne.s32.totalorder %s160, %s162
      %p169 = scmp.eq.s32.totalorder %s26, 1
      %p170 = por %p168, %p169
      %p171 = scmp.ne.s32.totalorder %s162, %s163
      %p172 = scmp.eq.s32.totalorder %s26, 0
      %p173 = por %p171, %p172
      %p174 = scmp.ne.s32.totalorder %s162, %s163
      %p175 = scmp.eq.s32.totalorder %s27, 1
      %p176 = por %p174, %p175
      %p178 = scmp.ne.s32.totalorder %s163, %s177
      %p179 = scmp.eq.s32.totalorder %s27, 0
      %p180 = por %p178, %p179
      %s181 = ssub.s32 %s21, %s28
      %p182 = scmp.eq.s32.totalorder %s181, 0
      %s184 = sadd.s32 %s183, 1
      %s185 = scalar_select %p182, %s183, %s184
      %p188 = pneg %p182
      %p189 = scmp.eq.s32.totalorder %s21, 1
      %p190 = por %p188, %p189
      %p191 = scmp.ne.s32.totalorder %s183, %s186
      %p192 = scmp.eq.s32.totalorder %s21, 0
      %p193 = por %p191, %p192
      %p194 = scmp.ne.s32.totalorder %s183, %s186
      %p195 = scmp.eq.s32.totalorder %s26, 1
      %p196 = por %p194, %p195
      %p197 = scmp.ne.s32.totalorder %s186, %s187
      %p198 = scmp.eq.s32.totalorder %s26, 0
      %p199 = por %p197, %p198
      %p200 = scmp.ne.s32.totalorder %s186, %s187
      %p201 = scmp.eq.s32.totalorder %s27, 1
      %p202 = por %p200, %p201
      %p204 = scmp.ne.s32.totalorder %s187, %s203
      %p205 = scmp.eq.s32.totalorder %s27, 0
      %p206 = por %p204, %p205
      %p207 = scmp.le.s32.totalorder 1, %s21
      %p208 = scmp.lt.s32.totalorder %s21, 3
      %p209 = pnand %p207, %p208
      %p210 = pneg %p209
      // Predicated region
      $region9: #{tpu_custom_call.1} parent=5 // pred_check
        _
      $region10: #{tpu_custom_call.1} parent=5 // pred_check_branch
        %212 = sbr.rel (%p209) target = $region12
      $region11: #{tpu_custom_call.1} parent=5 // pred_region
        %s213 = ssub.s32 %s21, 1
        // Predicated region
        $region13: #{tpu_custom_call.1} parent=11 // pred_check
          %p214 = pneg %p68
        $region14: #{tpu_custom_call.1} parent=11 // pred_check_branch
          %216 = sbr.rel (%p214) target = $region16
        $region15: #{tpu_custom_call.1} parent=11 // pred_region
          %218 = vsyncadd [#allocation6], 0
          %s219 = sshll.u32 %s1, 4
          %s220 = int_to_ptr.hbm [resolvable:$true] %s219
          %s221 = sshll.u32 [#allocation5], 4
          %s222 = int_to_ptr.vmem [resolvable:$true] %s221
          %227 = dma.hbm_to_vmem [thread:$0]  %s220, 1024, %s222, [#allocation6], 64, 64, 4
        $region16: #{tpu_custom_call.1} parent=11 // pred_fallthru
          _
        // Predicated region
        $region17: #{tpu_custom_call.1} parent=11 // pred_check
          %p228 = pneg %p89
        $region18: #{tpu_custom_call.1} parent=11 // pred_check_branch
          %230 = sbr.rel (%p228) target = $region20
        $region19: #{tpu_custom_call.1} parent=11 // pred_region
          _
        $region20: #{tpu_custom_call.1} parent=11 // pred_fallthru
          _
        // Predicated region
        $region21: #{tpu_custom_call.1} parent=11 // pred_check
          %p231 = pneg %p110
        $region22: #{tpu_custom_call.1} parent=11 // pred_check_branch
          %233 = sbr.rel (%p231) target = $region24
        $region23: #{tpu_custom_call.1} parent=11 // pred_region
          %235 = vsyncadd [#allocation6], 0
          %s236 = sshll.u32 %s3, 4
          %s237 = int_to_ptr.hbm [resolvable:$true] %s236
          %s238 = sshll.u32 [#allocation7], 4
          %s239 = int_to_ptr.vmem [resolvable:$true] %s238
          %244 = dma.hbm_to_vmem [thread:$0]  %s237, 1024, %s239, [#allocation6], 64, 64, 4
        $region24: #{tpu_custom_call.1} parent=11 // pred_fallthru
          _
        // Predicated region
        $region25: #{tpu_custom_call.1} parent=11 // pred_check
          %p245 = pneg %p131
        $region26: #{tpu_custom_call.1} parent=11 // pred_check_branch
          %247 = sbr.rel (%p245) target = $region28
        $region27: #{tpu_custom_call.1} parent=11 // pred_region
          _
        $region28: #{tpu_custom_call.1} parent=11 // pred_fallthru
          _
        // Predicated region
        $region29: #{tpu_custom_call.1} parent=11 // pred_check
          %p248 = pneg %p152
        $region30: #{tpu_custom_call.1} parent=11 // pred_check_branch
          %250 = sbr.rel (%p248) target = $region32
        $region31: #{tpu_custom_call.1} parent=11 // pred_region
          %252 = vsyncadd [#allocation9], 0
          %s253 = sshll.u32 %s5, 4
          %s254 = int_to_ptr.hbm [resolvable:$true] %s253
          %s255 = sshll.u32 [#allocation8], 4
          %s256 = int_to_ptr.vmem [resolvable:$true] %s255
          %261 = dma.hbm_to_vmem [thread:$0]  %s254, 1024, %s256, [#allocation9], 64, 64, 4
        $region32: #{tpu_custom_call.1} parent=11 // pred_fallthru
          _
        // Predicated region
        $region33: #{tpu_custom_call.1} parent=11 // pred_check
          %p262 = pneg %p173
        $region34: #{tpu_custom_call.1} parent=11 // pred_check_branch
          %264 = sbr.rel (%p262) target = $region36
        $region35: #{tpu_custom_call.1} parent=11 // pred_region
          _
        $region36: #{tpu_custom_call.1} parent=11 // pred_fallthru
          _
      $region12: #{tpu_custom_call.1} parent=5 // pred_fallthru
        _
      %p265 = scmp.lt.s32.totalorder %s21, 2
      // Predicated region
      $region37: #{tpu_custom_call.1} parent=5 // pred_check
        %p266 = pneg %p265
      $region38: #{tpu_custom_call.1} parent=5 // pred_check_branch
        %268 = sbr.rel (%p266) target = $region40
      $region39: #{tpu_custom_call.1} parent=5 // pred_region
        // Predicated region
        $region41: #{tpu_custom_call.1} parent=39 // pred_check
          %p269 = pneg %p41
        $region42: #{tpu_custom_call.1} parent=39 // pred_check_branch
          %271 = sbr.rel (%p269) target = $region44
        $region43: #{tpu_custom_call.1} parent=39 // pred_region
          %s272 = sand.u32 %s31, 1
          %s273 = scalar_lea.sflag [#allocation3], %s272
          %s274 = sand.u32 %s31, 1
          %s275 = smul.addr %s274, 256
          %s276 = scalar_lea.vmem [#allocation2], %s275
          %s277 = smul.u32 64, %s21
          %279 = vsyncadd %s273, 0
          %s280 = smul.addr %s277, 4
          %s281 = scalar_lea.hbm %s0, %s280
          %s282 = sshll.u32 %s281, 4
          %s283 = int_to_ptr.hbm [resolvable:$true] %s282
          %s284 = sshll.u32 %s276, 4
          %s285 = int_to_ptr.vmem [resolvable:$true] %s284
          %290 = dma.hbm_to_vmem [thread:$0]  %s283, 4096, %s285, %s273, 64, 64, 4
        $region44: #{tpu_custom_call.1} parent=39 // pred_fallthru
          _
      $region40: #{tpu_custom_call.1} parent=5 // pred_fallthru
        _
      %p291 = scmp.le.s32.totalorder 1, %s21
      %p292 = scmp.lt.s32.totalorder %s21, 3
      %p293 = pnand %p291, %p292
      %p294 = pneg %p293
      // Predicated region
      $region45: #{tpu_custom_call.1} parent=5 // pred_check
        _
      $region46: #{tpu_custom_call.1} parent=5 // pred_check_branch
        %296 = sbr.rel (%p293) target = $region48
      $region47: #{tpu_custom_call.1} parent=5 // pred_region
        %s297 = ssub.s32 %s21, 1
        %s298 = sand.u32 %s34, 1
        %s299 = scalar_lea.sflag [#allocation3], %s298
        %s300 = sand.u32 %s34, 1
        %s301 = smul.addr %s300, 256
        %s302 = scalar_lea.vmem [#allocation2], %s301
        // Predicated region
        $region49: #{tpu_custom_call.1} parent=47 // pred_check
          %p303 = pneg %p47
        $region50: #{tpu_custom_call.1} parent=47 // pred_check_branch
          %305 = sbr.rel (%p303) target = $region52
        $region51: #{tpu_custom_call.1} parent=47 // pred_region
          %307 = dma.done %s299, 4096
        $region52: #{tpu_custom_call.1} parent=47 // pred_fallthru
          _
        // Predicated region
        $region53: #{tpu_custom_call.1} parent=47 // pred_check
          %p308 = pneg %p68
        $region54: #{tpu_custom_call.1} parent=47 // pred_check_branch
          %310 = sbr.rel (%p308) target = $region56
        $region55: #{tpu_custom_call.1} parent=47 // pred_region
          %312 = dma.done [#allocation6], 1024
        $region56: #{tpu_custom_call.1} parent=47 // pred_fallthru
          _
        // Predicated region
        $region57: #{tpu_custom_call.1} parent=47 // pred_check
          %p313 = pneg %p110
        $region58: #{tpu_custom_call.1} parent=47 // pred_check_branch
          %315 = sbr.rel (%p313) target = $region60
        $region59: #{tpu_custom_call.1} parent=47 // pred_region
          %317 = dma.done [#allocation6], 1024
        $region60: #{tpu_custom_call.1} parent=47 // pred_fallthru
          _
        // Predicated region
        $region61: #{tpu_custom_call.1} parent=47 // pred_check
          %p318 = pneg %p152
        $region62: #{tpu_custom_call.1} parent=47 // pred_check_branch
          %320 = sbr.rel (%p318) target = $region64
        $region63: #{tpu_custom_call.1} parent=47 // pred_region
          %322 = dma.done [#allocation9], 1024
        $region64: #{tpu_custom_call.1} parent=47 // pred_fallthru
          _
        %s323 = sand.u32 %s34, 1
        %s324 = scalar_lea.sflag [#allocation3], %s323
        %s325 = sand.u32 %s34, 1
        %s326 = smul.addr %s325, 256
        %s327 = scalar_lea.vmem [#allocation2], %s326
        %p328 = pneg %p47
        %p329 = pneg %p44
        %p330 = pneg %p68
        %p331 = pneg %p65
        %p332 = pneg %p89
        %p333 = pneg %p86
        %p334 = pneg %p110
        %p335 = pneg %p107
        %p336 = pneg %p131
        %p337 = pneg %p128
        %p338 = pneg %p152
        %p339 = pneg %p149
        %p340 = pneg %p173
        %p341 = pneg %p170
        %p342 = pneg %p199
        %p343 = pneg %p196
        %s344 = sand.u32 %s186, 1
        %s345 = scalar_lea.sflag [#allocation4], %s344
        %s346 = sand.u32 %s186, 1
        %s347 = smul.addr %s346, 512
        %s348 = scalar_lea.vmem [#allocation10], %s347
        %s349 = smul.u32 64, %s26
        %s350 = smul.u32 64, %s26
        %v351 = vld [vmem:[%s302] sm:$0xf]
        %v352 = vld [vmem:[%s302 + $0x4] sm:$0xf]
        %v353 = vld [vmem:[%s302 + $0x8] sm:$0xf]
        %v354 = vld [vmem:[%s302 + $0xc] sm:$0xf]
        %v355 = vld [vmem:[%s302 + $0x10] sm:$0xf]
        %v356 = vld [vmem:[%s302 + $0x14] sm:$0xf]
        %v357 = vld [vmem:[%s302 + $0x18] sm:$0xf]
        %v358 = vld [vmem:[%s302 + $0x1c] sm:$0xf]
        %v359 = vld [vmem:[%s302 + $0x20] sm:$0xf]
        %v360 = vld [vmem:[%s302 + $0x24] sm:$0xf]
        %v361 = vld [vmem:[%s302 + $0x28] sm:$0xf]
        %v362 = vld [vmem:[%s302 + $0x2c] sm:$0xf]
        %v363 = vld [vmem:[%s302 + $0x30] sm:$0xf]
        %v364 = vld [vmem:[%s302 + $0x34] sm:$0xf]
        %v365 = vld [vmem:[%s302 + $0x38] sm:$0xf]
        %v366 = vld [vmem:[%s302 + $0x3c] sm:$0xf]
        %v367 = vld [vmem:[%s302 + $0x40] sm:$0xf]
        %v368 = vld [vmem:[%s302 + $0x44] sm:$0xf]
        %v369 = vld [vmem:[%s302 + $0x48] sm:$0xf]
        %v370 = vld [vmem:[%s302 + $0x4c] sm:$0xf]
        %v371 = vld [vmem:[%s302 + $0x50] sm:$0xf]
        %v372 = vld [vmem:[%s302 + $0x54] sm:$0xf]
        %v373 = vld [vmem:[%s302 + $0x58] sm:$0xf]
        %v374 = vld [vmem:[%s302 + $0x5c] sm:$0xf]
        %v375 = vld [vmem:[%s302 + $0x60] sm:$0xf]
        %v376 = vld [vmem:[%s302 + $0x64] sm:$0xf]
        %v377 = vld [vmem:[%s302 + $0x68] sm:$0xf]
        %v378 = vld [vmem:[%s302 + $0x6c] sm:$0xf]
        %v379 = vld [vmem:[%s302 + $0x70] sm:$0xf]
        %v380 = vld [vmem:[%s302 + $0x74] sm:$0xf]
        %v381 = vld [vmem:[%s302 + $0x78] sm:$0xf]
        %v382 = vld [vmem:[%s302 + $0x7c] sm:$0xf]
        %v383 = vld [vmem:[%s302 + $0x80] sm:$0xf]
        %v384 = vld [vmem:[%s302 + $0x84] sm:$0xf]
        %v385 = vld [vmem:[%s302 + $0x88] sm:$0xf]
        %v386 = vld [vmem:[%s302 + $0x8c] sm:$0xf]
        %v387 = vld [vmem:[%s302 + $0x90] sm:$0xf]
        %v388 = vld [vmem:[%s302 + $0x94] sm:$0xf]
        %v389 = vld [vmem:[%s302 + $0x98] sm:$0xf]
        %v390 = vld [vmem:[%s302 + $0x9c] sm:$0xf]
        %v391 = vld [vmem:[%s302 + $0xa0] sm:$0xf]
        %v392 = vld [vmem:[%s302 + $0xa4] sm:$0xf]
        %v393 = vld [vmem:[%s302 + $0xa8] sm:$0xf]
        %v394 = vld [vmem:[%s302 + $0xac] sm:$0xf]
        %v395 = vld [vmem:[%s302 + $0xb0] sm:$0xf]
        %v396 = vld [vmem:[%s302 + $0xb4] sm:$0xf]
        %v397 = vld [vmem:[%s302 + $0xb8] sm:$0xf]
        %v398 = vld [vmem:[%s302 + $0xbc] sm:$0xf]
        %v399 = vld [vmem:[%s302 + $0xc0] sm:$0xf]
        %v400 = vld [vmem:[%s302 + $0xc4] sm:$0xf]
        %v401 = vld [vmem:[%s302 + $0xc8] sm:$0xf]
        %v402 = vld [vmem:[%s302 + $0xcc] sm:$0xf]
        %v403 = vld [vmem:[%s302 + $0xd0] sm:$0xf]
        %v404 = vld [vmem:[%s302 + $0xd4] sm:$0xf]
        %v405 = vld [vmem:[%s302 + $0xd8] sm:$0xf]
        %v406 = vld [vmem:[%s302 + $0xdc] sm:$0xf]
        %v407 = vld [vmem:[%s302 + $0xe0] sm:$0xf]
        %v408 = vld [vmem:[%s302 + $0xe4] sm:$0xf]
        %v409 = vld [vmem:[%s302 + $0xe8] sm:$0xf]
        %v410 = vld [vmem:[%s302 + $0xec] sm:$0xf]
        %v411 = vld [vmem:[%s302 + $0xf0] sm:$0xf]
        %v412 = vld [vmem:[%s302 + $0xf4] sm:$0xf]
        %v413 = vld [vmem:[%s302 + $0xf8] sm:$0xf]
        %v414 = vld [vmem:[%s302 + $0xfc] sm:$0xf]
        %v415 = vld [vmem:[#allocation5] sm:$0xf]
        %v416 = vld [vmem:[#allocation5 + $0x4] sm:$0xf]
        %v417 = vld [vmem:[#allocation5 + $0x8] sm:$0xf]
        %v418 = vld [vmem:[#allocation5 + $0xc] sm:$0xf]
        %v419 = vld [vmem:[#allocation5 + $0x10] sm:$0xf]
        %v420 = vld [vmem:[#allocation5 + $0x14] sm:$0xf]
        %v421 = vld [vmem:[#allocation5 + $0x18] sm:$0xf]
        %v422 = vld [vmem:[#allocation5 + $0x1c] sm:$0xf]
        %v423 = vld [vmem:[#allocation5 + $0x20] sm:$0xf]
        %v424 = vld [vmem:[#allocation5 + $0x24] sm:$0xf]
        %v425 = vld [vmem:[#allocation5 + $0x28] sm:$0xf]
        %v426 = vld [vmem:[#allocation5 + $0x2c] sm:$0xf]
        %v427 = vld [vmem:[#allocation5 + $0x30] sm:$0xf]
        %v428 = vld [vmem:[#allocation5 + $0x34] sm:$0xf]
        %v429 = vld [vmem:[#allocation5 + $0x38] sm:$0xf]
        %v430 = vld [vmem:[#allocation5 + $0x3c] sm:$0xf]
        %v431 = vld [vmem:[%s2] sm:$0x1]
        %v433 = vperm.slane %v431, 0
        %v499 = vunpack.c.l.b16 %v351
        %v500 = vunpack.c.l.b16 %v352
        %v501 = vunpack.c.l.b16 %v353
        %v502 = vunpack.c.l.b16 %v354
        %v503 = vunpack.c.l.b16 %v355
        %v504 = vunpack.c.l.b16 %v356
        %v505 = vunpack.c.l.b16 %v357
        %v506 = vunpack.c.l.b16 %v358
        %v507 = vunpack.c.l.b16 %v359
        %v508 = vunpack.c.l.b16 %v360
        %v509 = vunpack.c.l.b16 %v361
        %v510 = vunpack.c.l.b16 %v362
        %v511 = vunpack.c.l.b16 %v363
        %v512 = vunpack.c.l.b16 %v364
        %v513 = vunpack.c.l.b16 %v365
        %v514 = vunpack.c.l.b16 %v366
        %v515 = vunpack.c.l.b16 %v367
        %v516 = vunpack.c.l.b16 %v368
        %v517 = vunpack.c.l.b16 %v369
        %v518 = vunpack.c.l.b16 %v370
        %v519 = vunpack.c.l.b16 %v371
        %v520 = vunpack.c.l.b16 %v372
        %v521 = vunpack.c.l.b16 %v373
        %v522 = vunpack.c.l.b16 %v374
        %v523 = vunpack.c.l.b16 %v375
        %v524 = vunpack.c.l.b16 %v376
        %v525 = vunpack.c.l.b16 %v377
        %v526 = vunpack.c.l.b16 %v378
        %v527 = vunpack.c.l.b16 %v379
        %v528 = vunpack.c.l.b16 %v380
        %v529 = vunpack.c.l.b16 %v381
        %v530 = vunpack.c.l.b16 %v382
        %v531 = vunpack.c.l.b16 %v383
        %v532 = vunpack.c.l.b16 %v384
        %v533 = vunpack.c.l.b16 %v385
        %v534 = vunpack.c.l.b16 %v386
        %v535 = vunpack.c.l.b16 %v387
        %v536 = vunpack.c.l.b16 %v388
        %v537 = vunpack.c.l.b16 %v389
        %v538 = vunpack.c.l.b16 %v390
        %v539 = vunpack.c.l.b16 %v391
        %v540 = vunpack.c.l.b16 %v392
        %v541 = vunpack.c.l.b16 %v393
        %v542 = vunpack.c.l.b16 %v394
        %v543 = vunpack.c.l.b16 %v395
        %v544 = vunpack.c.l.b16 %v396
        %v545 = vunpack.c.l.b16 %v397
        %v546 = vunpack.c.l.b16 %v398
        %v547 = vunpack.c.l.b16 %v399
        %v548 = vunpack.c.l.b16 %v400
        %v549 = vunpack.c.l.b16 %v401
        %v550 = vunpack.c.l.b16 %v402
        %v551 = vunpack.c.l.b16 %v403
        %v552 = vunpack.c.l.b16 %v404
        %v553 = vunpack.c.l.b16 %v405
        %v554 = vunpack.c.l.b16 %v406
        %v555 = vunpack.c.l.b16 %v407
        %v556 = vunpack.c.l.b16 %v408
        %v557 = vunpack.c.l.b16 %v409
        %v558 = vunpack.c.l.b16 %v410
        %v559 = vunpack.c.l.b16 %v411
        %v560 = vunpack.c.l.b16 %v412
        %v561 = vunpack.c.l.b16 %v413
        %v562 = vunpack.c.l.b16 %v414
        %v563 = vpack.c.b16 %v500, %v499
        %v564 = vpack.c.b16 %v502, %v501
        %v565 = vpack.c.b16 %v504, %v503
        %v566 = vpack.c.b16 %v506, %v505
        %v567 = vpack.c.b16 %v508, %v507
        %v568 = vpack.c.b16 %v510, %v509
        %v569 = vpack.c.b16 %v512, %v511
        %v570 = vpack.c.b16 %v514, %v513
        %v571 = vpack.c.b16 %v516, %v515
        %v572 = vpack.c.b16 %v518, %v517
        %v573 = vpack.c.b16 %v520, %v519
        %v574 = vpack.c.b16 %v522, %v521
        %v575 = vpack.c.b16 %v524, %v523
        %v576 = vpack.c.b16 %v526, %v525
        %v577 = vpack.c.b16 %v528, %v527
        %v578 = vpack.c.b16 %v530, %v529
        %v579 = vpack.c.b16 %v532, %v531
        %v580 = vpack.c.b16 %v534, %v533
        %v581 = vpack.c.b16 %v536, %v535
        %v582 = vpack.c.b16 %v538, %v537
        %v583 = vpack.c.b16 %v540, %v539
        %v584 = vpack.c.b16 %v542, %v541
        %v585 = vpack.c.b16 %v544, %v543
        %v586 = vpack.c.b16 %v546, %v545
        %v587 = vpack.c.b16 %v548, %v547
        %v588 = vpack.c.b16 %v550, %v549
        %v589 = vpack.c.b16 %v552, %v551
        %v590 = vpack.c.b16 %v554, %v553
        %v591 = vpack.c.b16 %v556, %v555
        %v592 = vpack.c.b16 %v558, %v557
        %v593 = vpack.c.b16 %v560, %v559
        %v594 = vpack.c.b16 %v562, %v561
        %v643 = vunpack.c.l.b16 %v415
        %v644 = vunpack.c.l.b16 %v416
        %v645 = vunpack.c.l.b16 %v417
        %v646 = vunpack.c.l.b16 %v418
        %v647 = vunpack.c.l.b16 %v419
        %v648 = vunpack.c.l.b16 %v420
        %v649 = vunpack.c.l.b16 %v421
        %v650 = vunpack.c.l.b16 %v422
        %v651 = vunpack.c.l.b16 %v423
        %v652 = vunpack.c.l.b16 %v424
        %v653 = vunpack.c.l.b16 %v425
        %v654 = vunpack.c.l.b16 %v426
        %v655 = vunpack.c.l.b16 %v427
        %v656 = vunpack.c.l.b16 %v428
        %v657 = vunpack.c.l.b16 %v429
        %v658 = vunpack.c.l.b16 %v430
        %v659 = vpack.c.b16 %v644, %v643
        %v660 = vpack.c.b16 %v646, %v645
        %v661 = vpack.c.b16 %v648, %v647
        %v662 = vpack.c.b16 %v650, %v649
        %v663 = vpack.c.b16 %v652, %v651
        %v664 = vpack.c.b16 %v654, %v653
        %v665 = vpack.c.b16 %v656, %v655
        %v666 = vpack.c.b16 %v658, %v657
        %675 = vmatpush.bf16.msra.mxu0 %v666
        %676 = vmatpush.bf16.msra.mxu0 %v665
        %677 = vmatpush.bf16.msra.mxu0 %v664
        %678 = vmatpush.bf16.msra.mxu0 %v663
        %679 = vmatpush.bf16.msra.mxu0 %v662
        %680 = vmatpush.bf16.msra.mxu0 %v661
        %681 = vmatpush.bf16.msra.mxu0 %v660
        %682 = vmatpush.bf16.msra.mxu0 %v659
        %683 = vmatmul.bf16.gmra.mxu0 %v563
        %v684 = vpop.f32.mrf.mxu0
        %v685 = vadd.f32 %v433, %v684
        %v686 = vpop.f32.mrf.mxu0
        %v687 = vadd.f32 %v433, %v686
        %688 = vmatmul.bf16.gmra.mxu0 %v564
        %v689 = vpop.f32.mrf.mxu0
        %v690 = vadd.f32 %v433, %v689
        %v691 = vpop.f32.mrf.mxu0
        %v692 = vadd.f32 %v433, %v691
        %693 = vmatmul.bf16.gmra.mxu0 %v565
        %v694 = vpop.f32.mrf.mxu0
        %v695 = vadd.f32 %v433, %v694
        %v696 = vpop.f32.mrf.mxu0
        %v697 = vadd.f32 %v433, %v696
        %698 = vmatmul.bf16.gmra.mxu0 %v566
        %v699 = vpop.f32.mrf.mxu0
        %v700 = vadd.f32 %v433, %v699
        %v701 = vpop.f32.mrf.mxu0
        %v702 = vadd.f32 %v433, %v701
        %703 = vmatmul.bf16.gmra.mxu0 %v567
        %v704 = vpop.f32.mrf.mxu0
        %v705 = vadd.f32 %v433, %v704
        %v706 = vpop.f32.mrf.mxu0
        %v707 = vadd.f32 %v433, %v706
        %708 = vmatmul.bf16.gmra.mxu0 %v568
        %v709 = vpop.f32.mrf.mxu0
        %v710 = vadd.f32 %v433, %v709
        %v711 = vpop.f32.mrf.mxu0
        %v712 = vadd.f32 %v433, %v711
        %713 = vmatmul.bf16.gmra.mxu0 %v569
        %v714 = vpop.f32.mrf.mxu0
        %v715 = vadd.f32 %v433, %v714
        %v716 = vpop.f32.mrf.mxu0
        %v717 = vadd.f32 %v433, %v716
        %718 = vmatmul.bf16.gmra.mxu0 %v570
        %v719 = vpop.f32.mrf.mxu0
        %v720 = vadd.f32 %v433, %v719
        %v721 = vpop.f32.mrf.mxu0
        %v722 = vadd.f32 %v433, %v721
        %723 = vmatmul.bf16.gmra.mxu0 %v571
        %v724 = vpop.f32.mrf.mxu0
        %v725 = vadd.f32 %v433, %v724
        %v726 = vpop.f32.mrf.mxu0
        %v727 = vadd.f32 %v433, %v726
        %728 = vmatmul.bf16.gmra.mxu0 %v572
        %v729 = vpop.f32.mrf.mxu0
        %v730 = vadd.f32 %v433, %v729
        %v731 = vpop.f32.mrf.mxu0
        %v732 = vadd.f32 %v433, %v731
        %733 = vmatmul.bf16.gmra.mxu0 %v573
        %v734 = vpop.f32.mrf.mxu0
        %v735 = vadd.f32 %v433, %v734
        %v736 = vpop.f32.mrf.mxu0
        %v737 = vadd.f32 %v433, %v736
        %738 = vmatmul.bf16.gmra.mxu0 %v574
        %v739 = vpop.f32.mrf.mxu0
        %v740 = vadd.f32 %v433, %v739
        %v741 = vpop.f32.mrf.mxu0
        %v742 = vadd.f32 %v433, %v741
        %743 = vmatmul.bf16.gmra.mxu0 %v575
        %v744 = vpop.f32.mrf.mxu0
        %v745 = vadd.f32 %v433, %v744
        %v746 = vpop.f32.mrf.mxu0
        %v747 = vadd.f32 %v433, %v746
        %748 = vmatmul.bf16.gmra.mxu0 %v576
        %v749 = vpop.f32.mrf.mxu0
        %v750 = vadd.f32 %v433, %v749
        %v751 = vpop.f32.mrf.mxu0
        %v752 = vadd.f32 %v433, %v751
        %753 = vmatmul.bf16.gmra.mxu0 %v577
        %v754 = vpop.f32.mrf.mxu0
        %v755 = vadd.f32 %v433, %v754
        %v756 = vpop.f32.mrf.mxu0
        %v757 = vadd.f32 %v433, %v756
        %758 = vmatmul.bf16.gmra.mxu0 %v578
        %v759 = vpop.f32.mrf.mxu0
        %v760 = vadd.f32 %v433, %v759
        %v761 = vpop.f32.mrf.mxu0
        %v762 = vadd.f32 %v433, %v761
        %763 = vmatmul.bf16.gmra.mxu0 %v579
        %v764 = vpop.f32.mrf.mxu0
        %v765 = vadd.f32 %v433, %v764
        %v766 = vpop.f32.mrf.mxu0
        %v767 = vadd.f32 %v433, %v766
        %768 = vmatmul.bf16.gmra.mxu0 %v580
        %v769 = vpop.f32.mrf.mxu0
        %v770 = vadd.f32 %v433, %v769
        %v771 = vpop.f32.mrf.mxu0
        %v772 = vadd.f32 %v433, %v771
        %773 = vmatmul.bf16.gmra.mxu0 %v581
        %v774 = vpop.f32.mrf.mxu0
        %v775 = vadd.f32 %v433, %v774
        %v776 = vpop.f32.mrf.mxu0
        %v777 = vadd.f32 %v433, %v776
        %778 = vmatmul.bf16.gmra.mxu0 %v582
        %v779 = vpop.f32.mrf.mxu0
        %v780 = vadd.f32 %v433, %v779
        %v781 = vpop.f32.mrf.mxu0
        %v782 = vadd.f32 %v433, %v781
        %783 = vmatmul.bf16.gmra.mxu0 %v583
        %v784 = vpop.f32.mrf.mxu0
        %v785 = vadd.f32 %v433, %v784
        %v786 = vpop.f32.mrf.mxu0
        %v787 = vadd.f32 %v433, %v786
        %788 = vmatmul.bf16.gmra.mxu0 %v584
        %v789 = vpop.f32.mrf.mxu0
        %v790 = vadd.f32 %v433, %v789
        %v791 = vpop.f32.mrf.mxu0
        %v792 = vadd.f32 %v433, %v791
        %793 = vmatmul.bf16.gmra.mxu0 %v585
        %v794 = vpop.f32.mrf.mxu0
        %v795 = vadd.f32 %v433, %v794
        %v796 = vpop.f32.mrf.mxu0
        %v797 = vadd.f32 %v433, %v796
        %798 = vmatmul.bf16.gmra.mxu0 %v586
        %v799 = vpop.f32.mrf.mxu0
        %v800 = vadd.f32 %v433, %v799
        %v801 = vpop.f32.mrf.mxu0
        %v802 = vadd.f32 %v433, %v801
        %803 = vmatmul.bf16.gmra.mxu0 %v587
        %v804 = vpop.f32.mrf.mxu0
        %v805 = vadd.f32 %v433, %v804
        %v806 = vpop.f32.mrf.mxu0
        %v807 = vadd.f32 %v433, %v806
        %808 = vmatmul.bf16.gmra.mxu0 %v588
        %v809 = vpop.f32.mrf.mxu0
        %v810 = vadd.f32 %v433, %v809
        %v811 = vpop.f32.mrf.mxu0
        %v812 = vadd.f32 %v433, %v811
        %813 = vmatmul.bf16.gmra.mxu0 %v589
        %v814 = vpop.f32.mrf.mxu0
        %v815 = vadd.f32 %v433, %v814
        %v816 = vpop.f32.mrf.mxu0
        %v817 = vadd.f32 %v433, %v816
        %818 = vmatmul.bf16.gmra.mxu0 %v590
        %v819 = vpop.f32.mrf.mxu0
        %v820 = vadd.f32 %v433, %v819
        %v821 = vpop.f32.mrf.mxu0
        %v822 = vadd.f32 %v433, %v821
        %823 = vmatmul.bf16.gmra.mxu0 %v591
        %v824 = vpop.f32.mrf.mxu0
        %v825 = vadd.f32 %v433, %v824
        %v826 = vpop.f32.mrf.mxu0
        %v827 = vadd.f32 %v433, %v826
        %828 = vmatmul.bf16.gmra.mxu0 %v592
        %v829 = vpop.f32.mrf.mxu0
        %v830 = vadd.f32 %v433, %v829
        %v831 = vpop.f32.mrf.mxu0
        %v832 = vadd.f32 %v433, %v831
        %833 = vmatmul.bf16.gmra.mxu0 %v593
        %v834 = vpop.f32.mrf.mxu0
        %v835 = vadd.f32 %v433, %v834
        %v836 = vpop.f32.mrf.mxu0
        %v837 = vadd.f32 %v433, %v836
        %838 = vmatmul.bf16.gmra.mxu0 %v594
        %v839 = vpop.f32.mrf.mxu0
        %v840 = vadd.f32 %v433, %v839
        %v841 = vpop.f32.mrf.mxu0
        %v842 = vadd.f32 %v433, %v841
        %843 = vdwg.mxu0
        %vm844 = vcmp.gt.f32.partialorder %v685, 0.0
        %vm845 = vcmp.gt.f32.partialorder %v687, 0.0
        %vm846 = vcmp.gt.f32.partialorder %v690, 0.0
        %vm847 = vcmp.gt.f32.partialorder %v692, 0.0
        %vm848 = vcmp.gt.f32.partialorder %v695, 0.0
        %vm849 = vcmp.gt.f32.partialorder %v697, 0.0
        %vm850 = vcmp.gt.f32.partialorder %v700, 0.0
        %vm851 = vcmp.gt.f32.partialorder %v702, 0.0
        %vm852 = vcmp.gt.f32.partialorder %v705, 0.0
        %vm853 = vcmp.gt.f32.partialorder %v707, 0.0
        %vm854 = vcmp.gt.f32.partialorder %v710, 0.0
        %vm855 = vcmp.gt.f32.partialorder %v712, 0.0
        %vm856 = vcmp.gt.f32.partialorder %v715, 0.0
        %vm857 = vcmp.gt.f32.partialorder %v717, 0.0
        %vm858 = vcmp.gt.f32.partialorder %v720, 0.0
        %vm859 = vcmp.gt.f32.partialorder %v722, 0.0
        %vm860 = vcmp.gt.f32.partialorder %v725, 0.0
        %vm861 = vcmp.gt.f32.partialorder %v727, 0.0
        %vm862 = vcmp.gt.f32.partialorder %v730, 0.0
        %vm863 = vcmp.gt.f32.partialorder %v732, 0.0
        %vm864 = vcmp.gt.f32.partialorder %v735, 0.0
        %vm865 = vcmp.gt.f32.partialorder %v737, 0.0
        %vm866 = vcmp.gt.f32.partialorder %v740, 0.0
        %vm867 = vcmp.gt.f32.partialorder %v742, 0.0
        %vm868 = vcmp.gt.f32.partialorder %v745, 0.0
        %vm869 = vcmp.gt.f32.partialorder %v747, 0.0
        %vm870 = vcmp.gt.f32.partialorder %v750, 0.0
        %vm871 = vcmp.gt.f32.partialorder %v752, 0.0
        %vm872 = vcmp.gt.f32.partialorder %v755, 0.0
        %vm873 = vcmp.gt.f32.partialorder %v757, 0.0
        %vm874 = vcmp.gt.f32.partialorder %v760, 0.0
        %vm875 = vcmp.gt.f32.partialorder %v762, 0.0
        %vm876 = vcmp.gt.f32.partialorder %v765, 0.0
        %vm877 = vcmp.gt.f32.partialorder %v767, 0.0
        %vm878 = vcmp.gt.f32.partialorder %v770, 0.0
        %vm879 = vcmp.gt.f32.partialorder %v772, 0.0
        %vm880 = vcmp.gt.f32.partialorder %v775, 0.0
        %vm881 = vcmp.gt.f32.partialorder %v777, 0.0
        %vm882 = vcmp.gt.f32.partialorder %v780, 0.0
        %vm883 = vcmp.gt.f32.partialorder %v782, 0.0
        %vm884 = vcmp.gt.f32.partialorder %v785, 0.0
        %vm885 = vcmp.gt.f32.partialorder %v787, 0.0
        %vm886 = vcmp.gt.f32.partialorder %v790, 0.0
        %vm887 = vcmp.gt.f32.partialorder %v792, 0.0
        %vm888 = vcmp.gt.f32.partialorder %v795, 0.0
        %vm889 = vcmp.gt.f32.partialorder %v797, 0.0
        %vm890 = vcmp.gt.f32.partialorder %v800, 0.0
        %vm891 = vcmp.gt.f32.partialorder %v802, 0.0
        %vm892 = vcmp.gt.f32.partialorder %v805, 0.0
        %vm893 = vcmp.gt.f32.partialorder %v807, 0.0
        %vm894 = vcmp.gt.f32.partialorder %v810, 0.0
        %vm895 = vcmp.gt.f32.partialorder %v812, 0.0
        %vm896 = vcmp.gt.f32.partialorder %v815, 0.0
        %vm897 = vcmp.gt.f32.partialorder %v817, 0.0
        %vm898 = vcmp.gt.f32.partialorder %v820, 0.0
        %vm899 = vcmp.gt.f32.partialorder %v822, 0.0
        %vm900 = vcmp.gt.f32.partialorder %v825, 0.0
        %vm901 = vcmp.gt.f32.partialorder %v827, 0.0
        %vm902 = vcmp.gt.f32.partialorder %v830, 0.0
        %vm903 = vcmp.gt.f32.partialorder %v832, 0.0
        %vm904 = vcmp.gt.f32.partialorder %v835, 0.0
        %vm905 = vcmp.gt.f32.partialorder %v837, 0.0
        %vm906 = vcmp.gt.f32.partialorder %v840, 0.0
        %vm907 = vcmp.gt.f32.partialorder %v842, 0.0
        %v908 = vmul.f32 %v685, 0.2
        %v909 = vmul.f32 %v687, 0.2
        %v910 = vmul.f32 %v690, 0.2
        %v911 = vmul.f32 %v692, 0.2
        %v912 = vmul.f32 %v695, 0.2
        %v913 = vmul.f32 %v697, 0.2
        %v914 = vmul.f32 %v700, 0.2
        %v915 = vmul.f32 %v702, 0.2
        %v916 = vmul.f32 %v705, 0.2
        %v917 = vmul.f32 %v707, 0.2
        %v918 = vmul.f32 %v710, 0.2
        %v919 = vmul.f32 %v712, 0.2
        %v920 = vmul.f32 %v715, 0.2
        %v921 = vmul.f32 %v717, 0.2
        %v922 = vmul.f32 %v720, 0.2
        %v923 = vmul.f32 %v722, 0.2
        %v924 = vmul.f32 %v725, 0.2
        %v925 = vmul.f32 %v727, 0.2
        %v926 = vmul.f32 %v730, 0.2
        %v927 = vmul.f32 %v732, 0.2
        %v928 = vmul.f32 %v735, 0.2
        %v929 = vmul.f32 %v737, 0.2
        %v930 = vmul.f32 %v740, 0.2
        %v931 = vmul.f32 %v742, 0.2
        %v932 = vmul.f32 %v745, 0.2
        %v933 = vmul.f32 %v747, 0.2
        %v934 = vmul.f32 %v750, 0.2
        %v935 = vmul.f32 %v752, 0.2
        %v936 = vmul.f32 %v755, 0.2
        %v937 = vmul.f32 %v757, 0.2
        %v938 = vmul.f32 %v760, 0.2
        %v939 = vmul.f32 %v762, 0.2
        %v940 = vmul.f32 %v765, 0.2
        %v941 = vmul.f32 %v767, 0.2
        %v942 = vmul.f32 %v770, 0.2
        %v943 = vmul.f32 %v772, 0.2
        %v944 = vmul.f32 %v775, 0.2
        %v945 = vmul.f32 %v777, 0.2
        %v946 = vmul.f32 %v780, 0.2
        %v947 = vmul.f32 %v782, 0.2
        %v948 = vmul.f32 %v785, 0.2
        %v949 = vmul.f32 %v787, 0.2
        %v950 = vmul.f32 %v790, 0.2
        %v951 = vmul.f32 %v792, 0.2
        %v952 = vmul.f32 %v795, 0.2
        %v953 = vmul.f32 %v797, 0.2
        %v954 = vmul.f32 %v800, 0.2
        %v955 = vmul.f32 %v802, 0.2
        %v956 = vmul.f32 %v805, 0.2
        %v957 = vmul.f32 %v807, 0.2
        %v958 = vmul.f32 %v810, 0.2
        %v959 = vmul.f32 %v812, 0.2
        %v960 = vmul.f32 %v815, 0.2
        %v961 = vmul.f32 %v817, 0.2
        %v962 = vmul.f32 %v820, 0.2
        %v963 = vmul.f32 %v822, 0.2
        %v964 = vmul.f32 %v825, 0.2
        %v965 = vmul.f32 %v827, 0.2
        %v966 = vmul.f32 %v830, 0.2
        %v967 = vmul.f32 %v832, 0.2
        %v968 = vmul.f32 %v835, 0.2
        %v969 = vmul.f32 %v837, 0.2
        %v970 = vmul.f32 %v840, 0.2
        %v971 = vmul.f32 %v842, 0.2
        %v972 = vsel %vm844, %v685, %v908
        %v973 = vsel %vm845, %v687, %v909
        %v974 = vsel %vm846, %v690, %v910
        %v975 = vsel %vm847, %v692, %v911
        %v976 = vsel %vm848, %v695, %v912
        %v977 = vsel %vm849, %v697, %v913
        %v978 = vsel %vm850, %v700, %v914
        %v979 = vsel %vm851, %v702, %v915
        %v980 = vsel %vm852, %v705, %v916
        %v981 = vsel %vm853, %v707, %v917
        %v982 = vsel %vm854, %v710, %v918
        %v983 = vsel %vm855, %v712, %v919
        %v984 = vsel %vm856, %v715, %v920
        %v985 = vsel %vm857, %v717, %v921
        %v986 = vsel %vm858, %v720, %v922
        %v987 = vsel %vm859, %v722, %v923
        %v988 = vsel %vm860, %v725, %v924
        %v989 = vsel %vm861, %v727, %v925
        %v990 = vsel %vm862, %v730, %v926
        %v991 = vsel %vm863, %v732, %v927
        %v992 = vsel %vm864, %v735, %v928
        %v993 = vsel %vm865, %v737, %v929
        %v994 = vsel %vm866, %v740, %v930
        %v995 = vsel %vm867, %v742, %v931
        %v996 = vsel %vm868, %v745, %v932
        %v997 = vsel %vm869, %v747, %v933
        %v998 = vsel %vm870, %v750, %v934
        %v999 = vsel %vm871, %v752, %v935
        %v1000 = vsel %vm872, %v755, %v936
        %v1001 = vsel %vm873, %v757, %v937
        %v1002 = vsel %vm874, %v760, %v938
        %v1003 = vsel %vm875, %v762, %v939
        %v1004 = vsel %vm876, %v765, %v940
        %v1005 = vsel %vm877, %v767, %v941
        %v1006 = vsel %vm878, %v770, %v942
        %v1007 = vsel %vm879, %v772, %v943
        %v1008 = vsel %vm880, %v775, %v944
        %v1009 = vsel %vm881, %v777, %v945
        %v1010 = vsel %vm882, %v780, %v946
        %v1011 = vsel %vm883, %v782, %v947
        %v1012 = vsel %vm884, %v785, %v948
        %v1013 = vsel %vm885, %v787, %v949
        %v1014 = vsel %vm886, %v790, %v950
        %v1015 = vsel %vm887, %v792, %v951
        %v1016 = vsel %vm888, %v795, %v952
        %v1017 = vsel %vm889, %v797, %v953
        %v1018 = vsel %vm890, %v800, %v954
        %v1019 = vsel %vm891, %v802, %v955
        %v1020 = vsel %vm892, %v805, %v956
        %v1021 = vsel %vm893, %v807, %v957
        %v1022 = vsel %vm894, %v810, %v958
        %v1023 = vsel %vm895, %v812, %v959
        %v1024 = vsel %vm896, %v815, %v960
        %v1025 = vsel %vm897, %v817, %v961
        %v1026 = vsel %vm898, %v820, %v962
        %v1027 = vsel %vm899, %v822, %v963
        %v1028 = vsel %vm900, %v825, %v964
        %v1029 = vsel %vm901, %v827, %v965
        %v1030 = vsel %vm902, %v830, %v966
        %v1031 = vsel %vm903, %v832, %v967
        %v1032 = vsel %vm904, %v835, %v968
        %v1033 = vsel %vm905, %v837, %v969
        %v1034 = vsel %vm906, %v840, %v970
        %v1035 = vsel %vm907, %v842, %v971
        %v1036 = vpack.c.bf16 %v973, %v972
        %v1037 = vpack.c.bf16 %v975, %v974
        %v1038 = vpack.c.bf16 %v977, %v976
        %v1039 = vpack.c.bf16 %v979, %v978
        %v1040 = vpack.c.bf16 %v981, %v980
        %v1041 = vpack.c.bf16 %v983, %v982
        %v1042 = vpack.c.bf16 %v985, %v984
        %v1043 = vpack.c.bf16 %v987, %v986
        %v1044 = vpack.c.bf16 %v989, %v988
        %v1045 = vpack.c.bf16 %v991, %v990
        %v1046 = vpack.c.bf16 %v993, %v992
        %v1047 = vpack.c.bf16 %v995, %v994
        %v1048 = vpack.c.bf16 %v997, %v996
        %v1049 = vpack.c.bf16 %v999, %v998
        %v1050 = vpack.c.bf16 %v1001, %v1000
        %v1051 = vpack.c.bf16 %v1003, %v1002
        %v1052 = vpack.c.bf16 %v1005, %v1004
        %v1053 = vpack.c.bf16 %v1007, %v1006
        %v1054 = vpack.c.bf16 %v1009, %v1008
        %v1055 = vpack.c.bf16 %v1011, %v1010
        %v1056 = vpack.c.bf16 %v1013, %v1012
        %v1057 = vpack.c.bf16 %v1015, %v1014
        %v1058 = vpack.c.bf16 %v1017, %v1016
        %v1059 = vpack.c.bf16 %v1019, %v1018
        %v1060 = vpack.c.bf16 %v1021, %v1020
        %v1061 = vpack.c.bf16 %v1023, %v1022
        %v1062 = vpack.c.bf16 %v1025, %v1024
        %v1063 = vpack.c.bf16 %v1027, %v1026
        %v1064 = vpack.c.bf16 %v1029, %v1028
        %v1065 = vpack.c.bf16 %v1031, %v1030
        %v1066 = vpack.c.bf16 %v1033, %v1032
        %v1067 = vpack.c.bf16 %v1035, %v1034
        %v1068 = vld [vmem:[#allocation7] sm:$0xf]
        %v1069 = vld [vmem:[#allocation7 + $0x4] sm:$0xf]
        %v1070 = vld [vmem:[#allocation7 + $0x8] sm:$0xf]
        %v1071 = vld [vmem:[#allocation7 + $0xc] sm:$0xf]
        %v1072 = vld [vmem:[#allocation7 + $0x10] sm:$0xf]
        %v1073 = vld [vmem:[#allocation7 + $0x14] sm:$0xf]
        %v1074 = vld [vmem:[#allocation7 + $0x18] sm:$0xf]
        %v1075 = vld [vmem:[#allocation7 + $0x1c] sm:$0xf]
        %v1076 = vld [vmem:[#allocation7 + $0x20] sm:$0xf]
        %v1077 = vld [vmem:[#allocation7 + $0x24] sm:$0xf]
        %v1078 = vld [vmem:[#allocation7 + $0x28] sm:$0xf]
        %v1079 = vld [vmem:[#allocation7 + $0x2c] sm:$0xf]
        %v1080 = vld [vmem:[#allocation7 + $0x30] sm:$0xf]
        %v1081 = vld [vmem:[#allocation7 + $0x34] sm:$0xf]
        %v1082 = vld [vmem:[#allocation7 + $0x38] sm:$0xf]
        %v1083 = vld [vmem:[#allocation7 + $0x3c] sm:$0xf]
        %v1084 = vld [vmem:[%s4] sm:$0x1]
        %v1086 = vperm.slane %v1084, 0
        %v1104 = vunpack.c.l.b16 %v1068
        %v1105 = vunpack.c.l.b16 %v1069
        %v1106 = vunpack.c.l.b16 %v1070
        %v1107 = vunpack.c.l.b16 %v1071
        %v1108 = vunpack.c.l.b16 %v1072
        %v1109 = vunpack.c.l.b16 %v1073
        %v1110 = vunpack.c.l.b16 %v1074
        %v1111 = vunpack.c.l.b16 %v1075
        %v1112 = vunpack.c.l.b16 %v1076
        %v1113 = vunpack.c.l.b16 %v1077
        %v1114 = vunpack.c.l.b16 %v1078
        %v1115 = vunpack.c.l.b16 %v1079
        %v1116 = vunpack.c.l.b16 %v1080
        %v1117 = vunpack.c.l.b16 %v1081
        %v1118 = vunpack.c.l.b16 %v1082
        %v1119 = vunpack.c.l.b16 %v1083
        %v1120 = vpack.c.b16 %v1105, %v1104
        %v1121 = vpack.c.b16 %v1107, %v1106
        %v1122 = vpack.c.b16 %v1109, %v1108
        %v1123 = vpack.c.b16 %v1111, %v1110
        %v1124 = vpack.c.b16 %v1113, %v1112
        %v1125 = vpack.c.b16 %v1115, %v1114
        %v1126 = vpack.c.b16 %v1117, %v1116
        %v1127 = vpack.c.b16 %v1119, %v1118
        %1136 = vmatpush.bf16.msra.mxu0 %v1127
        %1137 = vmatpush.bf16.msra.mxu0 %v1126
        %1138 = vmatpush.bf16.msra.mxu0 %v1125
        %1139 = vmatpush.bf16.msra.mxu0 %v1124
        %1140 = vmatpush.bf16.msra.mxu0 %v1123
        %1141 = vmatpush.bf16.msra.mxu0 %v1122
        %1142 = vmatpush.bf16.msra.mxu0 %v1121
        %1143 = vmatpush.bf16.msra.mxu0 %v1120
        %1144 = vmatmul.bf16.gmra.mxu0 %v1036
        %v1145 = vpop.f32.mrf.mxu0
        %v1146 = vadd.f32 %v1086, %v1145
        %v1147 = vpop.f32.mrf.mxu0
        %v1148 = vadd.f32 %v1086, %v1147
        %1149 = vmatmul.bf16.gmra.mxu0 %v1037
        %v1150 = vpop.f32.mrf.mxu0
        %v1151 = vadd.f32 %v1086, %v1150
        %v1152 = vpop.f32.mrf.mxu0
        %v1153 = vadd.f32 %v1086, %v1152
        %1154 = vmatmul.bf16.gmra.mxu0 %v1038
        %v1155 = vpop.f32.mrf.mxu0
        %v1156 = vadd.f32 %v1086, %v1155
        %v1157 = vpop.f32.mrf.mxu0
        %v1158 = vadd.f32 %v1086, %v1157
        %1159 = vmatmul.bf16.gmra.mxu0 %v1039
        %v1160 = vpop.f32.mrf.mxu0
        %v1161 = vadd.f32 %v1086, %v1160
        %v1162 = vpop.f32.mrf.mxu0
        %v1163 = vadd.f32 %v1086, %v1162
        %1164 = vmatmul.bf16.gmra.mxu0 %v1040
        %v1165 = vpop.f32.mrf.mxu0
        %v1166 = vadd.f32 %v1086, %v1165
        %v1167 = vpop.f32.mrf.mxu0
        %v1168 = vadd.f32 %v1086, %v1167
        %1169 = vmatmul.bf16.gmra.mxu0 %v1041
        %v1170 = vpop.f32.mrf.mxu0
        %v1171 = vadd.f32 %v1086, %v1170
        %v1172 = vpop.f32.mrf.mxu0
        %v1173 = vadd.f32 %v1086, %v1172
        %1174 = vmatmul.bf16.gmra.mxu0 %v1042
        %v1175 = vpop.f32.mrf.mxu0
        %v1176 = vadd.f32 %v1086, %v1175
        %v1177 = vpop.f32.mrf.mxu0
        %v1178 = vadd.f32 %v1086, %v1177
        %1179 = vmatmul.bf16.gmra.mxu0 %v1043
        %v1180 = vpop.f32.mrf.mxu0
        %v1181 = vadd.f32 %v1086, %v1180
        %v1182 = vpop.f32.mrf.mxu0
        %v1183 = vadd.f32 %v1086, %v1182
        %1184 = vmatmul.bf16.gmra.mxu0 %v1044
        %v1185 = vpop.f32.mrf.mxu0
        %v1186 = vadd.f32 %v1086, %v1185
        %v1187 = vpop.f32.mrf.mxu0
        %v1188 = vadd.f32 %v1086, %v1187
        %1189 = vmatmul.bf16.gmra.mxu0 %v1045
        %v1190 = vpop.f32.mrf.mxu0
        %v1191 = vadd.f32 %v1086, %v1190
        %v1192 = vpop.f32.mrf.mxu0
        %v1193 = vadd.f32 %v1086, %v1192
        %1194 = vmatmul.bf16.gmra.mxu0 %v1046
        %v1195 = vpop.f32.mrf.mxu0
        %v1196 = vadd.f32 %v1086, %v1195
        %v1197 = vpop.f32.mrf.mxu0
        %v1198 = vadd.f32 %v1086, %v1197
        %1199 = vmatmul.bf16.gmra.mxu0 %v1047
        %v1200 = vpop.f32.mrf.mxu0
        %v1201 = vadd.f32 %v1086, %v1200
        %v1202 = vpop.f32.mrf.mxu0
        %v1203 = vadd.f32 %v1086, %v1202
        %1204 = vmatmul.bf16.gmra.mxu0 %v1048
        %v1205 = vpop.f32.mrf.mxu0
        %v1206 = vadd.f32 %v1086, %v1205
        %v1207 = vpop.f32.mrf.mxu0
        %v1208 = vadd.f32 %v1086, %v1207
        %1209 = vmatmul.bf16.gmra.mxu0 %v1049
        %v1210 = vpop.f32.mrf.mxu0
        %v1211 = vadd.f32 %v1086, %v1210
        %v1212 = vpop.f32.mrf.mxu0
        %v1213 = vadd.f32 %v1086, %v1212
        %1214 = vmatmul.bf16.gmra.mxu0 %v1050
        %v1215 = vpop.f32.mrf.mxu0
        %v1216 = vadd.f32 %v1086, %v1215
        %v1217 = vpop.f32.mrf.mxu0
        %v1218 = vadd.f32 %v1086, %v1217
        %1219 = vmatmul.bf16.gmra.mxu0 %v1051
        %v1220 = vpop.f32.mrf.mxu0
        %v1221 = vadd.f32 %v1086, %v1220
        %v1222 = vpop.f32.mrf.mxu0
        %v1223 = vadd.f32 %v1086, %v1222
        %1224 = vmatmul.bf16.gmra.mxu0 %v1052
        %v1225 = vpop.f32.mrf.mxu0
        %v1226 = vadd.f32 %v1086, %v1225
        %v1227 = vpop.f32.mrf.mxu0
        %v1228 = vadd.f32 %v1086, %v1227
        %1229 = vmatmul.bf16.gmra.mxu0 %v1053
        %v1230 = vpop.f32.mrf.mxu0
        %v1231 = vadd.f32 %v1086, %v1230
        %v1232 = vpop.f32.mrf.mxu0
        %v1233 = vadd.f32 %v1086, %v1232
        %1234 = vmatmul.bf16.gmra.mxu0 %v1054
        %v1235 = vpop.f32.mrf.mxu0
        %v1236 = vadd.f32 %v1086, %v1235
        %v1237 = vpop.f32.mrf.mxu0
        %v1238 = vadd.f32 %v1086, %v1237
        %1239 = vmatmul.bf16.gmra.mxu0 %v1055
        %v1240 = vpop.f32.mrf.mxu0
        %v1241 = vadd.f32 %v1086, %v1240
        %v1242 = vpop.f32.mrf.mxu0
        %v1243 = vadd.f32 %v1086, %v1242
        %1244 = vmatmul.bf16.gmra.mxu0 %v1056
        %v1245 = vpop.f32.mrf.mxu0
        %v1246 = vadd.f32 %v1086, %v1245
        %v1247 = vpop.f32.mrf.mxu0
        %v1248 = vadd.f32 %v1086, %v1247
        %1249 = vmatmul.bf16.gmra.mxu0 %v1057
        %v1250 = vpop.f32.mrf.mxu0
        %v1251 = vadd.f32 %v1086, %v1250
        %v1252 = vpop.f32.mrf.mxu0
        %v1253 = vadd.f32 %v1086, %v1252
        %1254 = vmatmul.bf16.gmra.mxu0 %v1058
        %v1255 = vpop.f32.mrf.mxu0
        %v1256 = vadd.f32 %v1086, %v1255
        %v1257 = vpop.f32.mrf.mxu0
        %v1258 = vadd.f32 %v1086, %v1257
        %1259 = vmatmul.bf16.gmra.mxu0 %v1059
        %v1260 = vpop.f32.mrf.mxu0
        %v1261 = vadd.f32 %v1086, %v1260
        %v1262 = vpop.f32.mrf.mxu0
        %v1263 = vadd.f32 %v1086, %v1262
        %1264 = vmatmul.bf16.gmra.mxu0 %v1060
        %v1265 = vpop.f32.mrf.mxu0
        %v1266 = vadd.f32 %v1086, %v1265
        %v1267 = vpop.f32.mrf.mxu0
        %v1268 = vadd.f32 %v1086, %v1267
        %1269 = vmatmul.bf16.gmra.mxu0 %v1061
        %v1270 = vpop.f32.mrf.mxu0
        %v1271 = vadd.f32 %v1086, %v1270
        %v1272 = vpop.f32.mrf.mxu0
        %v1273 = vadd.f32 %v1086, %v1272
        %1274 = vmatmul.bf16.gmra.mxu0 %v1062
        %v1275 = vpop.f32.mrf.mxu0
        %v1276 = vadd.f32 %v1086, %v1275
        %v1277 = vpop.f32.mrf.mxu0
        %v1278 = vadd.f32 %v1086, %v1277
        %1279 = vmatmul.bf16.gmra.mxu0 %v1063
        %v1280 = vpop.f32.mrf.mxu0
        %v1281 = vadd.f32 %v1086, %v1280
        %v1282 = vpop.f32.mrf.mxu0
        %v1283 = vadd.f32 %v1086, %v1282
        %1284 = vmatmul.bf16.gmra.mxu0 %v1064
        %v1285 = vpop.f32.mrf.mxu0
        %v1286 = vadd.f32 %v1086, %v1285
        %v1287 = vpop.f32.mrf.mxu0
        %v1288 = vadd.f32 %v1086, %v1287
        %1289 = vmatmul.bf16.gmra.mxu0 %v1065
        %v1290 = vpop.f32.mrf.mxu0
        %v1291 = vadd.f32 %v1086, %v1290
        %v1292 = vpop.f32.mrf.mxu0
        %v1293 = vadd.f32 %v1086, %v1292
        %1294 = vmatmul.bf16.gmra.mxu0 %v1066
        %v1295 = vpop.f32.mrf.mxu0
        %v1296 = vadd.f32 %v1086, %v1295
        %v1297 = vpop.f32.mrf.mxu0
        %v1298 = vadd.f32 %v1086, %v1297
        %1299 = vmatmul.bf16.gmra.mxu0 %v1067
        %v1300 = vpop.f32.mrf.mxu0
        %v1301 = vadd.f32 %v1086, %v1300
        %v1302 = vpop.f32.mrf.mxu0
        %v1303 = vadd.f32 %v1086, %v1302
        %1304 = vdwg.mxu0
        %vm1305 = vcmp.gt.f32.partialorder %v1146, 0.0
        %vm1306 = vcmp.gt.f32.partialorder %v1148, 0.0
        %vm1307 = vcmp.gt.f32.partialorder %v1151, 0.0
        %vm1308 = vcmp.gt.f32.partialorder %v1153, 0.0
        %vm1309 = vcmp.gt.f32.partialorder %v1156, 0.0
        %vm1310 = vcmp.gt.f32.partialorder %v1158, 0.0
        %vm1311 = vcmp.gt.f32.partialorder %v1161, 0.0
        %vm1312 = vcmp.gt.f32.partialorder %v1163, 0.0
        %vm1313 = vcmp.gt.f32.partialorder %v1166, 0.0
        %vm1314 = vcmp.gt.f32.partialorder %v1168, 0.0
        %vm1315 = vcmp.gt.f32.partialorder %v1171, 0.0
        %vm1316 = vcmp.gt.f32.partialorder %v1173, 0.0
        %vm1317 = vcmp.gt.f32.partialorder %v1176, 0.0
        %vm1318 = vcmp.gt.f32.partialorder %v1178, 0.0
        %vm1319 = vcmp.gt.f32.partialorder %v1181, 0.0
        %vm1320 = vcmp.gt.f32.partialorder %v1183, 0.0
        %vm1321 = vcmp.gt.f32.partialorder %v1186, 0.0
        %vm1322 = vcmp.gt.f32.partialorder %v1188, 0.0
        %vm1323 = vcmp.gt.f32.partialorder %v1191, 0.0
        %vm1324 = vcmp.gt.f32.partialorder %v1193, 0.0
        %vm1325 = vcmp.gt.f32.partialorder %v1196, 0.0
        %vm1326 = vcmp.gt.f32.partialorder %v1198, 0.0
        %vm1327 = vcmp.gt.f32.partialorder %v1201, 0.0
        %vm1328 = vcmp.gt.f32.partialorder %v1203, 0.0
        %vm1329 = vcmp.gt.f32.partialorder %v1206, 0.0
        %vm1330 = vcmp.gt.f32.partialorder %v1208, 0.0
        %vm1331 = vcmp.gt.f32.partialorder %v1211, 0.0
        %vm1332 = vcmp.gt.f32.partialorder %v1213, 0.0
        %vm1333 = vcmp.gt.f32.partialorder %v1216, 0.0
        %vm1334 = vcmp.gt.f32.partialorder %v1218, 0.0
        %vm1335 = vcmp.gt.f32.partialorder %v1221, 0.0
        %vm1336 = vcmp.gt.f32.partialorder %v1223, 0.0
        %vm1337 = vcmp.gt.f32.partialorder %v1226, 0.0
        %vm1338 = vcmp.gt.f32.partialorder %v1228, 0.0
        %vm1339 = vcmp.gt.f32.partialorder %v1231, 0.0
        %vm1340 = vcmp.gt.f32.partialorder %v1233, 0.0
        %vm1341 = vcmp.gt.f32.partialorder %v1236, 0.0
        %vm1342 = vcmp.gt.f32.partialorder %v1238, 0.0
        %vm1343 = vcmp.gt.f32.partialorder %v1241, 0.0
        %vm1344 = vcmp.gt.f32.partialorder %v1243, 0.0
        %vm1345 = vcmp.gt.f32.partialorder %v1246, 0.0
        %vm1346 = vcmp.gt.f32.partialorder %v1248, 0.0
        %vm1347 = vcmp.gt.f32.partialorder %v1251, 0.0
        %vm1348 = vcmp.gt.f32.partialorder %v1253, 0.0
        %vm1349 = vcmp.gt.f32.partialorder %v1256, 0.0
        %vm1350 = vcmp.gt.f32.partialorder %v1258, 0.0
        %vm1351 = vcmp.gt.f32.partialorder %v1261, 0.0
        %vm1352 = vcmp.gt.f32.partialorder %v1263, 0.0
        %vm1353 = vcmp.gt.f32.partialorder %v1266, 0.0
        %vm1354 = vcmp.gt.f32.partialorder %v1268, 0.0
        %vm1355 = vcmp.gt.f32.partialorder %v1271, 0.0
        %vm1356 = vcmp.gt.f32.partialorder %v1273, 0.0
        %vm1357 = vcmp.gt.f32.partialorder %v1276, 0.0
        %vm1358 = vcmp.gt.f32.partialorder %v1278, 0.0
        %vm1359 = vcmp.gt.f32.partialorder %v1281, 0.0
        %vm1360 = vcmp.gt.f32.partialorder %v1283, 0.0
        %vm1361 = vcmp.gt.f32.partialorder %v1286, 0.0
        %vm1362 = vcmp.gt.f32.partialorder %v1288, 0.0
        %vm1363 = vcmp.gt.f32.partialorder %v1291, 0.0
        %vm1364 = vcmp.gt.f32.partialorder %v1293, 0.0
        %vm1365 = vcmp.gt.f32.partialorder %v1296, 0.0
        %vm1366 = vcmp.gt.f32.partialorder %v1298, 0.0
        %vm1367 = vcmp.gt.f32.partialorder %v1301, 0.0
        %vm1368 = vcmp.gt.f32.partialorder %v1303, 0.0
        %v1369 = vmul.f32 %v1146, 0.2
        %v1370 = vmul.f32 %v1148, 0.2
        %v1371 = vmul.f32 %v1151, 0.2
        %v1372 = vmul.f32 %v1153, 0.2
        %v1373 = vmul.f32 %v1156, 0.2
        %v1374 = vmul.f32 %v1158, 0.2
        %v1375 = vmul.f32 %v1161, 0.2
        %v1376 = vmul.f32 %v1163, 0.2
        %v1377 = vmul.f32 %v1166, 0.2
        %v1378 = vmul.f32 %v1168, 0.2
        %v1379 = vmul.f32 %v1171, 0.2
        %v1380 = vmul.f32 %v1173, 0.2
        %v1381 = vmul.f32 %v1176, 0.2
        %v1382 = vmul.f32 %v1178, 0.2
        %v1383 = vmul.f32 %v1181, 0.2
        %v1384 = vmul.f32 %v1183, 0.2
        %v1385 = vmul.f32 %v1186, 0.2
        %v1386 = vmul.f32 %v1188, 0.2
        %v1387 = vmul.f32 %v1191, 0.2
        %v1388 = vmul.f32 %v1193, 0.2
        %v1389 = vmul.f32 %v1196, 0.2
        %v1390 = vmul.f32 %v1198, 0.2
        %v1391 = vmul.f32 %v1201, 0.2
        %v1392 = vmul.f32 %v1203, 0.2
        %v1393 = vmul.f32 %v1206, 0.2
        %v1394 = vmul.f32 %v1208, 0.2
        %v1395 = vmul.f32 %v1211, 0.2
        %v1396 = vmul.f32 %v1213, 0.2
        %v1397 = vmul.f32 %v1216, 0.2
        %v1398 = vmul.f32 %v1218, 0.2
        %v1399 = vmul.f32 %v1221, 0.2
        %v1400 = vmul.f32 %v1223, 0.2
        %v1401 = vmul.f32 %v1226, 0.2
        %v1402 = vmul.f32 %v1228, 0.2
        %v1403 = vmul.f32 %v1231, 0.2
        %v1404 = vmul.f32 %v1233, 0.2
        %v1405 = vmul.f32 %v1236, 0.2
        %v1406 = vmul.f32 %v1238, 0.2
        %v1407 = vmul.f32 %v1241, 0.2
        %v1408 = vmul.f32 %v1243, 0.2
        %v1409 = vmul.f32 %v1246, 0.2
        %v1410 = vmul.f32 %v1248, 0.2
        %v1411 = vmul.f32 %v1251, 0.2
        %v1412 = vmul.f32 %v1253, 0.2
        %v1413 = vmul.f32 %v1256, 0.2
        %v1414 = vmul.f32 %v1258, 0.2
        %v1415 = vmul.f32 %v1261, 0.2
        %v1416 = vmul.f32 %v1263, 0.2
        %v1417 = vmul.f32 %v1266, 0.2
        %v1418 = vmul.f32 %v1268, 0.2
        %v1419 = vmul.f32 %v1271, 0.2
        %v1420 = vmul.f32 %v1273, 0.2
        %v1421 = vmul.f32 %v1276, 0.2
        %v1422 = vmul.f32 %v1278, 0.2
        %v1423 = vmul.f32 %v1281, 0.2
        %v1424 = vmul.f32 %v1283, 0.2
        %v1425 = vmul.f32 %v1286, 0.2
        %v1426 = vmul.f32 %v1288, 0.2
        %v1427 = vmul.f32 %v1291, 0.2
        %v1428 = vmul.f32 %v1293, 0.2
        %v1429 = vmul.f32 %v1296, 0.2
        %v1430 = vmul.f32 %v1298, 0.2
        %v1431 = vmul.f32 %v1301, 0.2
        %v1432 = vmul.f32 %v1303, 0.2
        %v1433 = vsel %vm1305, %v1146, %v1369
        %v1434 = vsel %vm1306, %v1148, %v1370
        %v1435 = vsel %vm1307, %v1151, %v1371
        %v1436 = vsel %vm1308, %v1153, %v1372
        %v1437 = vsel %vm1309, %v1156, %v1373
        %v1438 = vsel %vm1310, %v1158, %v1374
        %v1439 = vsel %vm1311, %v1161, %v1375
        %v1440 = vsel %vm1312, %v1163, %v1376
        %v1441 = vsel %vm1313, %v1166, %v1377
        %v1442 = vsel %vm1314, %v1168, %v1378
        %v1443 = vsel %vm1315, %v1171, %v1379
        %v1444 = vsel %vm1316, %v1173, %v1380
        %v1445 = vsel %vm1317, %v1176, %v1381
        %v1446 = vsel %vm1318, %v1178, %v1382
        %v1447 = vsel %vm1319, %v1181, %v1383
        %v1448 = vsel %vm1320, %v1183, %v1384
        %v1449 = vsel %vm1321, %v1186, %v1385
        %v1450 = vsel %vm1322, %v1188, %v1386
        %v1451 = vsel %vm1323, %v1191, %v1387
        %v1452 = vsel %vm1324, %v1193, %v1388
        %v1453 = vsel %vm1325, %v1196, %v1389
        %v1454 = vsel %vm1326, %v1198, %v1390
        %v1455 = vsel %vm1327, %v1201, %v1391
        %v1456 = vsel %vm1328, %v1203, %v1392
        %v1457 = vsel %vm1329, %v1206, %v1393
        %v1458 = vsel %vm1330, %v1208, %v1394
        %v1459 = vsel %vm1331, %v1211, %v1395
        %v1460 = vsel %vm1332, %v1213, %v1396
        %v1461 = vsel %vm1333, %v1216, %v1397
        %v1462 = vsel %vm1334, %v1218, %v1398
        %v1463 = vsel %vm1335, %v1221, %v1399
        %v1464 = vsel %vm1336, %v1223, %v1400
        %v1465 = vsel %vm1337, %v1226, %v1401
        %v1466 = vsel %vm1338, %v1228, %v1402
        %v1467 = vsel %vm1339, %v1231, %v1403
        %v1468 = vsel %vm1340, %v1233, %v1404
        %v1469 = vsel %vm1341, %v1236, %v1405
        %v1470 = vsel %vm1342, %v1238, %v1406
        %v1471 = vsel %vm1343, %v1241, %v1407
        %v1472 = vsel %vm1344, %v1243, %v1408
        %v1473 = vsel %vm1345, %v1246, %v1409
        %v1474 = vsel %vm1346, %v1248, %v1410
        %v1475 = vsel %vm1347, %v1251, %v1411
        %v1476 = vsel %vm1348, %v1253, %v1412
        %v1477 = vsel %vm1349, %v1256, %v1413
        %v1478 = vsel %vm1350, %v1258, %v1414
        %v1479 = vsel %vm1351, %v1261, %v1415
        %v1480 = vsel %vm1352, %v1263, %v1416
        %v1481 = vsel %vm1353, %v1266, %v1417
        %v1482 = vsel %vm1354, %v1268, %v1418
        %v1483 = vsel %vm1355, %v1271, %v1419
        %v1484 = vsel %vm1356, %v1273, %v1420
        %v1485 = vsel %vm1357, %v1276, %v1421
        %v1486 = vsel %vm1358, %v1278, %v1422
        %v1487 = vsel %vm1359, %v1281, %v1423
        %v1488 = vsel %vm1360, %v1283, %v1424
        %v1489 = vsel %vm1361, %v1286, %v1425
        %v1490 = vsel %vm1362, %v1288, %v1426
        %v1491 = vsel %vm1363, %v1291, %v1427
        %v1492 = vsel %vm1364, %v1293, %v1428
        %v1493 = vsel %vm1365, %v1296, %v1429
        %v1494 = vsel %vm1366, %v1298, %v1430
        %v1495 = vsel %vm1367, %v1301, %v1431
        %v1496 = vsel %vm1368, %v1303, %v1432
        %v1497 = vpack.c.bf16 %v1434, %v1433
        %v1498 = vpack.c.bf16 %v1436, %v1435
        %v1499 = vpack.c.bf16 %v1438, %v1437
        %v1500 = vpack.c.bf16 %v1440, %v1439
        %v1501 = vpack.c.bf16 %v1442, %v1441
        %v1502 = vpack.c.bf16 %v1444, %v1443
        %v1503 = vpack.c.bf16 %v1446, %v1445
        %v1504 = vpack.c.bf16 %v1448, %v1447
        %v1505 = vpack.c.bf16 %v1450, %v1449
        %v1506 = vpack.c.bf16 %v1452, %v1451
        %v1507 = vpack.c.bf16 %v1454, %v1453
        %v1508 = vpack.c.bf16 %v1456, %v1455
        %v1509 = vpack.c.bf16 %v1458, %v1457
        %v1510 = vpack.c.bf16 %v1460, %v1459
        %v1511 = vpack.c.bf16 %v1462, %v1461
        %v1512 = vpack.c.bf16 %v1464, %v1463
        %v1513 = vpack.c.bf16 %v1466, %v1465
        %v1514 = vpack.c.bf16 %v1468, %v1467
        %v1515 = vpack.c.bf16 %v1470, %v1469
        %v1516 = vpack.c.bf16 %v1472, %v1471
        %v1517 = vpack.c.bf16 %v1474, %v1473
        %v1518 = vpack.c.bf16 %v1476, %v1475
        %v1519 = vpack.c.bf16 %v1478, %v1477
        %v1520 = vpack.c.bf16 %v1480, %v1479
        %v1521 = vpack.c.bf16 %v1482, %v1481
        %v1522 = vpack.c.bf16 %v1484, %v1483
        %v1523 = vpack.c.bf16 %v1486, %v1485
        %v1524 = vpack.c.bf16 %v1488, %v1487
        %v1525 = vpack.c.bf16 %v1490, %v1489
        %v1526 = vpack.c.bf16 %v1492, %v1491
        %v1527 = vpack.c.bf16 %v1494, %v1493
        %v1528 = vpack.c.bf16 %v1496, %v1495
        %v1529 = vld [vmem:[#allocation8] sm:$0xf]
        %v1530 = vld [vmem:[#allocation8 + $0x4] sm:$0xf]
        %v1531 = vld [vmem:[#allocation8 + $0x8] sm:$0xf]
        %v1532 = vld [vmem:[#allocation8 + $0xc] sm:$0xf]
        %v1533 = vld [vmem:[#allocation8 + $0x10] sm:$0xf]
        %v1534 = vld [vmem:[#allocation8 + $0x14] sm:$0xf]
        %v1535 = vld [vmem:[#allocation8 + $0x18] sm:$0xf]
        %v1536 = vld [vmem:[#allocation8 + $0x1c] sm:$0xf]
        %v1537 = vld [vmem:[#allocation8 + $0x20] sm:$0xf]
        %v1538 = vld [vmem:[#allocation8 + $0x24] sm:$0xf]
        %v1539 = vld [vmem:[#allocation8 + $0x28] sm:$0xf]
        %v1540 = vld [vmem:[#allocation8 + $0x2c] sm:$0xf]
        %v1541 = vld [vmem:[#allocation8 + $0x30] sm:$0xf]
        %v1542 = vld [vmem:[#allocation8 + $0x34] sm:$0xf]
        %v1543 = vld [vmem:[#allocation8 + $0x38] sm:$0xf]
        %v1544 = vld [vmem:[#allocation8 + $0x3c] sm:$0xf]
        %v1545 = vld [vmem:[%s6] sm:$0x1]
        %v1547 = vperm.slane %v1545, 0
        %v1565 = vunpack.c.l.b16 %v1529
        %v1566 = vunpack.c.l.b16 %v1530
        %v1567 = vunpack.c.l.b16 %v1531
        %v1568 = vunpack.c.l.b16 %v1532
        %v1569 = vunpack.c.l.b16 %v1533
        %v1570 = vunpack.c.l.b16 %v1534
        %v1571 = vunpack.c.l.b16 %v1535
        %v1572 = vunpack.c.l.b16 %v1536
        %v1573 = vunpack.c.l.b16 %v1537
        %v1574 = vunpack.c.l.b16 %v1538
        %v1575 = vunpack.c.l.b16 %v1539
        %v1576 = vunpack.c.l.b16 %v1540
        %v1577 = vunpack.c.l.b16 %v1541
        %v1578 = vunpack.c.l.b16 %v1542
        %v1579 = vunpack.c.l.b16 %v1543
        %v1580 = vunpack.c.l.b16 %v1544
        %v1581 = vpack.c.b16 %v1566, %v1565
        %v1582 = vpack.c.b16 %v1568, %v1567
        %v1583 = vpack.c.b16 %v1570, %v1569
        %v1584 = vpack.c.b16 %v1572, %v1571
        %v1585 = vpack.c.b16 %v1574, %v1573
        %v1586 = vpack.c.b16 %v1576, %v1575
        %v1587 = vpack.c.b16 %v1578, %v1577
        %v1588 = vpack.c.b16 %v1580, %v1579
        %1597 = vmatpush.bf16.msra.mxu0 %v1588
        %1598 = vmatpush.bf16.msra.mxu0 %v1587
        %1599 = vmatpush.bf16.msra.mxu0 %v1586
        %1600 = vmatpush.bf16.msra.mxu0 %v1585
        %1601 = vmatpush.bf16.msra.mxu0 %v1584
        %1602 = vmatpush.bf16.msra.mxu0 %v1583
        %1603 = vmatpush.bf16.msra.mxu0 %v1582
        %1604 = vmatpush.bf16.msra.mxu0 %v1581
        %1605 = vmatmul.bf16.gmra.mxu0 %v1497
        %v1606 = vpop.f32.mrf.mxu0
        %v1607 = vadd.f32 %v1547, %v1606
        %v1608 = vpop.f32.mrf.mxu0
        %v1609 = vadd.f32 %v1547, %v1608
        %1610 = vmatmul.bf16.gmra.mxu0 %v1498
        %v1611 = vpop.f32.mrf.mxu0
        %v1612 = vadd.f32 %v1547, %v1611
        %v1613 = vpop.f32.mrf.mxu0
        %v1614 = vadd.f32 %v1547, %v1613
        %1615 = vmatmul.bf16.gmra.mxu0 %v1499
        %v1616 = vpop.f32.mrf.mxu0
        %v1617 = vadd.f32 %v1547, %v1616
        %v1618 = vpop.f32.mrf.mxu0
        %v1619 = vadd.f32 %v1547, %v1618
        %1620 = vmatmul.bf16.gmra.mxu0 %v1500
        %v1621 = vpop.f32.mrf.mxu0
        %v1622 = vadd.f32 %v1547, %v1621
        %v1623 = vpop.f32.mrf.mxu0
        %v1624 = vadd.f32 %v1547, %v1623
        %1625 = vmatmul.bf16.gmra.mxu0 %v1501
        %v1626 = vpop.f32.mrf.mxu0
        %v1627 = vadd.f32 %v1547, %v1626
        %v1628 = vpop.f32.mrf.mxu0
        %v1629 = vadd.f32 %v1547, %v1628
        %1630 = vmatmul.bf16.gmra.mxu0 %v1502
        %v1631 = vpop.f32.mrf.mxu0
        %v1632 = vadd.f32 %v1547, %v1631
        %v1633 = vpop.f32.mrf.mxu0
        %v1634 = vadd.f32 %v1547, %v1633
        %1635 = vmatmul.bf16.gmra.mxu0 %v1503
        %v1636 = vpop.f32.mrf.mxu0
        %v1637 = vadd.f32 %v1547, %v1636
        %v1638 = vpop.f32.mrf.mxu0
        %v1639 = vadd.f32 %v1547, %v1638
        %1640 = vmatmul.bf16.gmra.mxu0 %v1504
        %v1641 = vpop.f32.mrf.mxu0
        %v1642 = vadd.f32 %v1547, %v1641
        %v1643 = vpop.f32.mrf.mxu0
        %v1644 = vadd.f32 %v1547, %v1643
        %1645 = vmatmul.bf16.gmra.mxu0 %v1505
        %v1646 = vpop.f32.mrf.mxu0
        %v1647 = vadd.f32 %v1547, %v1646
        %v1648 = vpop.f32.mrf.mxu0
        %v1649 = vadd.f32 %v1547, %v1648
        %1650 = vmatmul.bf16.gmra.mxu0 %v1506
        %v1651 = vpop.f32.mrf.mxu0
        %v1652 = vadd.f32 %v1547, %v1651
        %v1653 = vpop.f32.mrf.mxu0
        %v1654 = vadd.f32 %v1547, %v1653
        %1655 = vmatmul.bf16.gmra.mxu0 %v1507
        %v1656 = vpop.f32.mrf.mxu0
        %v1657 = vadd.f32 %v1547, %v1656
        %v1658 = vpop.f32.mrf.mxu0
        %v1659 = vadd.f32 %v1547, %v1658
        %1660 = vmatmul.bf16.gmra.mxu0 %v1508
        %v1661 = vpop.f32.mrf.mxu0
        %v1662 = vadd.f32 %v1547, %v1661
        %v1663 = vpop.f32.mrf.mxu0
        %v1664 = vadd.f32 %v1547, %v1663
        %1665 = vmatmul.bf16.gmra.mxu0 %v1509
        %v1666 = vpop.f32.mrf.mxu0
        %v1667 = vadd.f32 %v1547, %v1666
        %v1668 = vpop.f32.mrf.mxu0
        %v1669 = vadd.f32 %v1547, %v1668
        %1670 = vmatmul.bf16.gmra.mxu0 %v1510
        %v1671 = vpop.f32.mrf.mxu0
        %v1672 = vadd.f32 %v1547, %v1671
        %v1673 = vpop.f32.mrf.mxu0
        %v1674 = vadd.f32 %v1547, %v1673
        %1675 = vmatmul.bf16.gmra.mxu0 %v1511
        %v1676 = vpop.f32.mrf.mxu0
        %v1677 = vadd.f32 %v1547, %v1676
        %v1678 = vpop.f32.mrf.mxu0
        %v1679 = vadd.f32 %v1547, %v1678
        %1680 = vmatmul.bf16.gmra.mxu0 %v1512
        %v1681 = vpop.f32.mrf.mxu0
        %v1682 = vadd.f32 %v1547, %v1681
        %v1683 = vpop.f32.mrf.mxu0
        %v1684 = vadd.f32 %v1547, %v1683
        %1685 = vmatmul.bf16.gmra.mxu0 %v1513
        %v1686 = vpop.f32.mrf.mxu0
        %v1687 = vadd.f32 %v1547, %v1686
        %v1688 = vpop.f32.mrf.mxu0
        %v1689 = vadd.f32 %v1547, %v1688
        %1690 = vmatmul.bf16.gmra.mxu0 %v1514
        %v1691 = vpop.f32.mrf.mxu0
        %v1692 = vadd.f32 %v1547, %v1691
        %v1693 = vpop.f32.mrf.mxu0
        %v1694 = vadd.f32 %v1547, %v1693
        %1695 = vmatmul.bf16.gmra.mxu0 %v1515
        %v1696 = vpop.f32.mrf.mxu0
        %v1697 = vadd.f32 %v1547, %v1696
        %v1698 = vpop.f32.mrf.mxu0
        %v1699 = vadd.f32 %v1547, %v1698
        %1700 = vmatmul.bf16.gmra.mxu0 %v1516
        %v1701 = vpop.f32.mrf.mxu0
        %v1702 = vadd.f32 %v1547, %v1701
        %v1703 = vpop.f32.mrf.mxu0
        %v1704 = vadd.f32 %v1547, %v1703
        %1705 = vmatmul.bf16.gmra.mxu0 %v1517
        %v1706 = vpop.f32.mrf.mxu0
        %v1707 = vadd.f32 %v1547, %v1706
        %v1708 = vpop.f32.mrf.mxu0
        %v1709 = vadd.f32 %v1547, %v1708
        %1710 = vmatmul.bf16.gmra.mxu0 %v1518
        %v1711 = vpop.f32.mrf.mxu0
        %v1712 = vadd.f32 %v1547, %v1711
        %v1713 = vpop.f32.mrf.mxu0
        %v1714 = vadd.f32 %v1547, %v1713
        %1715 = vmatmul.bf16.gmra.mxu0 %v1519
        %v1716 = vpop.f32.mrf.mxu0
        %v1717 = vadd.f32 %v1547, %v1716
        %v1718 = vpop.f32.mrf.mxu0
        %v1719 = vadd.f32 %v1547, %v1718
        %1720 = vmatmul.bf16.gmra.mxu0 %v1520
        %v1721 = vpop.f32.mrf.mxu0
        %v1722 = vadd.f32 %v1547, %v1721
        %v1723 = vpop.f32.mrf.mxu0
        %v1724 = vadd.f32 %v1547, %v1723
        %1725 = vmatmul.bf16.gmra.mxu0 %v1521
        %v1726 = vpop.f32.mrf.mxu0
        %v1727 = vadd.f32 %v1547, %v1726
        %v1728 = vpop.f32.mrf.mxu0
        %v1729 = vadd.f32 %v1547, %v1728
        %1730 = vmatmul.bf16.gmra.mxu0 %v1522
        %v1731 = vpop.f32.mrf.mxu0
        %v1732 = vadd.f32 %v1547, %v1731
        %v1733 = vpop.f32.mrf.mxu0
        %v1734 = vadd.f32 %v1547, %v1733
        %1735 = vmatmul.bf16.gmra.mxu0 %v1523
        %v1736 = vpop.f32.mrf.mxu0
        %v1737 = vadd.f32 %v1547, %v1736
        %v1738 = vpop.f32.mrf.mxu0
        %v1739 = vadd.f32 %v1547, %v1738
        %1740 = vmatmul.bf16.gmra.mxu0 %v1524
        %v1741 = vpop.f32.mrf.mxu0
        %v1742 = vadd.f32 %v1547, %v1741
        %v1743 = vpop.f32.mrf.mxu0
        %v1744 = vadd.f32 %v1547, %v1743
        %1745 = vmatmul.bf16.gmra.mxu0 %v1525
        %v1746 = vpop.f32.mrf.mxu0
        %v1747 = vadd.f32 %v1547, %v1746
        %v1748 = vpop.f32.mrf.mxu0
        %v1749 = vadd.f32 %v1547, %v1748
        %1750 = vmatmul.bf16.gmra.mxu0 %v1526
        %v1751 = vpop.f32.mrf.mxu0
        %v1752 = vadd.f32 %v1547, %v1751
        %v1753 = vpop.f32.mrf.mxu0
        %v1754 = vadd.f32 %v1547, %v1753
        %1755 = vmatmul.bf16.gmra.mxu0 %v1527
        %v1756 = vpop.f32.mrf.mxu0
        %v1757 = vadd.f32 %v1547, %v1756
        %v1758 = vpop.f32.mrf.mxu0
        %v1759 = vadd.f32 %v1547, %v1758
        %1760 = vmatmul.bf16.gmra.mxu0 %v1528
        %v1761 = vpop.f32.mrf.mxu0
        %v1762 = vadd.f32 %v1547, %v1761
        %v1763 = vpop.f32.mrf.mxu0
        %v1764 = vadd.f32 %v1547, %v1763
        %1765 = vdwg.mxu0
        %v1766 = vsub.f32 0.0, %v1607
        %v1767 = vsub.f32 0.0, %v1609
        %v1768 = vsub.f32 0.0, %v1612
        %v1769 = vsub.f32 0.0, %v1614
        %v1770 = vsub.f32 0.0, %v1617
        %v1771 = vsub.f32 0.0, %v1619
        %v1772 = vsub.f32 0.0, %v1622
        %v1773 = vsub.f32 0.0, %v1624
        %v1774 = vsub.f32 0.0, %v1627
        %v1775 = vsub.f32 0.0, %v1629
        %v1776 = vsub.f32 0.0, %v1632
        %v1777 = vsub.f32 0.0, %v1634
        %v1778 = vsub.f32 0.0, %v1637
        %v1779 = vsub.f32 0.0, %v1639
        %v1780 = vsub.f32 0.0, %v1642
        %v1781 = vsub.f32 0.0, %v1644
        %v1782 = vsub.f32 0.0, %v1647
        %v1783 = vsub.f32 0.0, %v1649
        %v1784 = vsub.f32 0.0, %v1652
        %v1785 = vsub.f32 0.0, %v1654
        %v1786 = vsub.f32 0.0, %v1657
        %v1787 = vsub.f32 0.0, %v1659
        %v1788 = vsub.f32 0.0, %v1662
        %v1789 = vsub.f32 0.0, %v1664
        %v1790 = vsub.f32 0.0, %v1667
        %v1791 = vsub.f32 0.0, %v1669
        %v1792 = vsub.f32 0.0, %v1672
        %v1793 = vsub.f32 0.0, %v1674
        %v1794 = vsub.f32 0.0, %v1677
        %v1795 = vsub.f32 0.0, %v1679
        %v1796 = vsub.f32 0.0, %v1682
        %v1797 = vsub.f32 0.0, %v1684
        %v1798 = vsub.f32 0.0, %v1687
        %v1799 = vsub.f32 0.0, %v1689
        %v1800 = vsub.f32 0.0, %v1692
        %v1801 = vsub.f32 0.0, %v1694
        %v1802 = vsub.f32 0.0, %v1697
        %v1803 = vsub.f32 0.0, %v1699
        %v1804 = vsub.f32 0.0, %v1702
        %v1805 = vsub.f32 0.0, %v1704
        %v1806 = vsub.f32 0.0, %v1707
        %v1807 = vsub.f32 0.0, %v1709
        %v1808 = vsub.f32 0.0, %v1712
        %v1809 = vsub.f32 0.0, %v1714
        %v1810 = vsub.f32 0.0, %v1717
        %v1811 = vsub.f32 0.0, %v1719
        %v1812 = vsub.f32 0.0, %v1722
        %v1813 = vsub.f32 0.0, %v1724
        %v1814 = vsub.f32 0.0, %v1727
        %v1815 = vsub.f32 0.0, %v1729
        %v1816 = vsub.f32 0.0, %v1732
        %v1817 = vsub.f32 0.0, %v1734
        %v1818 = vsub.f32 0.0, %v1737
        %v1819 = vsub.f32 0.0, %v1739
        %v1820 = vsub.f32 0.0, %v1742
        %v1821 = vsub.f32 0.0, %v1744
        %v1822 = vsub.f32 0.0, %v1747
        %v1823 = vsub.f32 0.0, %v1749
        %v1824 = vsub.f32 0.0, %v1752
        %v1825 = vsub.f32 0.0, %v1754
        %v1826 = vsub.f32 0.0, %v1757
        %v1827 = vsub.f32 0.0, %v1759
        %v1828 = vsub.f32 0.0, %v1762
        %v1829 = vsub.f32 0.0, %v1764
        %v1830 = vmul.f32 %v1766, 1.442695
        %v1831 = vpow.pop %v1830
        %v1832 = vmul.f32 %v1767, 1.442695
        %v1833 = vpow.pop %v1832
        %v1834 = vmul.f32 %v1768, 1.442695
        %v1835 = vpow.pop %v1834
        %v1836 = vmul.f32 %v1769, 1.442695
        %v1837 = vpow.pop %v1836
        %v1838 = vmul.f32 %v1770, 1.442695
        %v1839 = vpow.pop %v1838
        %v1840 = vmul.f32 %v1771, 1.442695
        %v1841 = vpow.pop %v1840
        %v1842 = vmul.f32 %v1772, 1.442695
        %v1843 = vpow.pop %v1842
        %v1844 = vmul.f32 %v1773, 1.442695
        %v1845 = vpow.pop %v1844
        %v1846 = vmul.f32 %v1774, 1.442695
        %v1847 = vpow.pop %v1846
        %v1848 = vmul.f32 %v1775, 1.442695
        %v1849 = vpow.pop %v1848
        %v1850 = vmul.f32 %v1776, 1.442695
        %v1851 = vpow.pop %v1850
        %v1852 = vmul.f32 %v1777, 1.442695
        %v1853 = vpow.pop %v1852
        %v1854 = vmul.f32 %v1778, 1.442695
        %v1855 = vpow.pop %v1854
        %v1856 = vmul.f32 %v1779, 1.442695
        %v1857 = vpow.pop %v1856
        %v1858 = vmul.f32 %v1780, 1.442695
        %v1859 = vpow.pop %v1858
        %v1860 = vmul.f32 %v1781, 1.442695
        %v1861 = vpow.pop %v1860
        %v1862 = vmul.f32 %v1782, 1.442695
        %v1863 = vpow.pop %v1862
        %v1864 = vmul.f32 %v1783, 1.442695
        %v1865 = vpow.pop %v1864
        %v1866 = vmul.f32 %v1784, 1.442695
        %v1867 = vpow.pop %v1866
        %v1868 = vmul.f32 %v1785, 1.442695
        %v1869 = vpow.pop %v1868
        %v1870 = vmul.f32 %v1786, 1.442695
        %v1871 = vpow.pop %v1870
        %v1872 = vmul.f32 %v1787, 1.442695
        %v1873 = vpow.pop %v1872
        %v1874 = vmul.f32 %v1788, 1.442695
        %v1875 = vpow.pop %v1874
        %v1876 = vmul.f32 %v1789, 1.442695
        %v1877 = vpow.pop %v1876
        %v1878 = vmul.f32 %v1790, 1.442695
        %v1879 = vpow.pop %v1878
        %v1880 = vmul.f32 %v1791, 1.442695
        %v1881 = vpow.pop %v1880
        %v1882 = vmul.f32 %v1792, 1.442695
        %v1883 = vpow.pop %v1882
        %v1884 = vmul.f32 %v1793, 1.442695
        %v1885 = vpow.pop %v1884
        %v1886 = vmul.f32 %v1794, 1.442695
        %v1887 = vpow.pop %v1886
        %v1888 = vmul.f32 %v1795, 1.442695
        %v1889 = vpow.pop %v1888
        %v1890 = vmul.f32 %v1796, 1.442695
        %v1891 = vpow.pop %v1890
        %v1892 = vmul.f32 %v1797, 1.442695
        %v1893 = vpow.pop %v1892
        %v1894 = vmul.f32 %v1798, 1.442695
        %v1895 = vpow.pop %v1894
        %v1896 = vmul.f32 %v1799, 1.442695
        %v1897 = vpow.pop %v1896
        %v1898 = vmul.f32 %v1800, 1.442695
        %v1899 = vpow.pop %v1898
        %v1900 = vmul.f32 %v1801, 1.442695
        %v1901 = vpow.pop %v1900
        %v1902 = vmul.f32 %v1802, 1.442695
        %v1903 = vpow.pop %v1902
        %v1904 = vmul.f32 %v1803, 1.442695
        %v1905 = vpow.pop %v1904
        %v1906 = vmul.f32 %v1804, 1.442695
        %v1907 = vpow.pop %v1906
        %v1908 = vmul.f32 %v1805, 1.442695
        %v1909 = vpow.pop %v1908
        %v1910 = vmul.f32 %v1806, 1.442695
        %v1911 = vpow.pop %v1910
        %v1912 = vmul.f32 %v1807, 1.442695
        %v1913 = vpow.pop %v1912
        %v1914 = vmul.f32 %v1808, 1.442695
        %v1915 = vpow.pop %v1914
        %v1916 = vmul.f32 %v1809, 1.442695
        %v1917 = vpow.pop %v1916
        %v1918 = vmul.f32 %v1810, 1.442695
        %v1919 = vpow.pop %v1918
        %v1920 = vmul.f32 %v1811, 1.442695
        %v1921 = vpow.pop %v1920
        %v1922 = vmul.f32 %v1812, 1.442695
        %v1923 = vpow.pop %v1922
        %v1924 = vmul.f32 %v1813, 1.442695
        %v1925 = vpow.pop %v1924
        %v1926 = vmul.f32 %v1814, 1.442695
        %v1927 = vpow.pop %v1926
        %v1928 = vmul.f32 %v1815, 1.442695
        %v1929 = vpow.pop %v1928
        %v1930 = vmul.f32 %v1816, 1.442695
        %v1931 = vpow.pop %v1930
        %v1932 = vmul.f32 %v1817, 1.442695
        %v1933 = vpow.pop %v1932
        %v1934 = vmul.f32 %v1818, 1.442695
        %v1935 = vpow.pop %v1934
        %v1936 = vmul.f32 %v1819, 1.442695
        %v1937 = vpow.pop %v1936
        %v1938 = vmul.f32 %v1820, 1.442695
        %v1939 = vpow.pop %v1938
        %v1940 = vmul.f32 %v1821, 1.442695
        %v1941 = vpow.pop %v1940
        %v1942 = vmul.f32 %v1822, 1.442695
        %v1943 = vpow.pop %v1942
        %v1944 = vmul.f32 %v1823, 1.442695
        %v1945 = vpow.pop %v1944
        %v1946 = vmul.f32 %v1824, 1.442695
        %v1947 = vpow.pop %v1946
        %v1948 = vmul.f32 %v1825, 1.442695
        %v1949 = vpow.pop %v1948
        %v1950 = vmul.f32 %v1826, 1.442695
        %v1951 = vpow.pop %v1950
        %v1952 = vmul.f32 %v1827, 1.442695
        %v1953 = vpow.pop %v1952
        %v1954 = vmul.f32 %v1828, 1.442695
        %v1955 = vpow.pop %v1954
        %v1956 = vmul.f32 %v1829, 1.442695
        %v1957 = vpow.pop %v1956
        %v1958 = vadd.f32 %v1831, 1.0
        %v1959 = vadd.f32 %v1833, 1.0
        %v1960 = vadd.f32 %v1835, 1.0
        %v1961 = vadd.f32 %v1837, 1.0
        %v1962 = vadd.f32 %v1839, 1.0
        %v1963 = vadd.f32 %v1841, 1.0
        %v1964 = vadd.f32 %v1843, 1.0
        %v1965 = vadd.f32 %v1845, 1.0
        %v1966 = vadd.f32 %v1847, 1.0
        %v1967 = vadd.f32 %v1849, 1.0
        %v1968 = vadd.f32 %v1851, 1.0
        %v1969 = vadd.f32 %v1853, 1.0
        %v1970 = vadd.f32 %v1855, 1.0
        %v1971 = vadd.f32 %v1857, 1.0
        %v1972 = vadd.f32 %v1859, 1.0
        %v1973 = vadd.f32 %v1861, 1.0
        %v1974 = vadd.f32 %v1863, 1.0
        %v1975 = vadd.f32 %v1865, 1.0
        %v1976 = vadd.f32 %v1867, 1.0
        %v1977 = vadd.f32 %v1869, 1.0
        %v1978 = vadd.f32 %v1871, 1.0
        %v1979 = vadd.f32 %v1873, 1.0
        %v1980 = vadd.f32 %v1875, 1.0
        %v1981 = vadd.f32 %v1877, 1.0
        %v1982 = vadd.f32 %v1879, 1.0
        %v1983 = vadd.f32 %v1881, 1.0
        %v1984 = vadd.f32 %v1883, 1.0
        %v1985 = vadd.f32 %v1885, 1.0
        %v1986 = vadd.f32 %v1887, 1.0
        %v1987 = vadd.f32 %v1889, 1.0
        %v1988 = vadd.f32 %v1891, 1.0
        %v1989 = vadd.f32 %v1893, 1.0
        %v1990 = vadd.f32 %v1895, 1.0
        %v1991 = vadd.f32 %v1897, 1.0
        %v1992 = vadd.f32 %v1899, 1.0
        %v1993 = vadd.f32 %v1901, 1.0
        %v1994 = vadd.f32 %v1903, 1.0
        %v1995 = vadd.f32 %v1905, 1.0
        %v1996 = vadd.f32 %v1907, 1.0
        %v1997 = vadd.f32 %v1909, 1.0
        %v1998 = vadd.f32 %v1911, 1.0
        %v1999 = vadd.f32 %v1913, 1.0
        %v2000 = vadd.f32 %v1915, 1.0
        %v2001 = vadd.f32 %v1917, 1.0
        %v2002 = vadd.f32 %v1919, 1.0
        %v2003 = vadd.f32 %v1921, 1.0
        %v2004 = vadd.f32 %v1923, 1.0
        %v2005 = vadd.f32 %v1925, 1.0
        %v2006 = vadd.f32 %v1927, 1.0
        %v2007 = vadd.f32 %v1929, 1.0
        %v2008 = vadd.f32 %v1931, 1.0
        %v2009 = vadd.f32 %v1933, 1.0
        %v2010 = vadd.f32 %v1935, 1.0
        %v2011 = vadd.f32 %v1937, 1.0
        %v2012 = vadd.f32 %v1939, 1.0
        %v2013 = vadd.f32 %v1941, 1.0
        %v2014 = vadd.f32 %v1943, 1.0
        %v2015 = vadd.f32 %v1945, 1.0
        %v2016 = vadd.f32 %v1947, 1.0
        %v2017 = vadd.f32 %v1949, 1.0
        %v2018 = vadd.f32 %v1951, 1.0
        %v2019 = vadd.f32 %v1953, 1.0
        %v2020 = vadd.f32 %v1955, 1.0
        %v2021 = vadd.f32 %v1957, 1.0
        %v2022 = vrcp.pop %v1958
        %v2023 = vrcp.pop %v1959
        %v2024 = vrcp.pop %v1960
        %v2025 = vrcp.pop %v1961
        %v2026 = vrcp.pop %v1962
        %v2027 = vrcp.pop %v1963
        %v2028 = vrcp.pop %v1964
        %v2029 = vrcp.pop %v1965
        %v2030 = vrcp.pop %v1966
        %v2031 = vrcp.pop %v1967
        %v2032 = vrcp.pop %v1968
        %v2033 = vrcp.pop %v1969
        %v2034 = vrcp.pop %v1970
        %v2035 = vrcp.pop %v1971
        %v2036 = vrcp.pop %v1972
        %v2037 = vrcp.pop %v1973
        %v2038 = vrcp.pop %v1974
        %v2039 = vrcp.pop %v1975
        %v2040 = vrcp.pop %v1976
        %v2041 = vrcp.pop %v1977
        %v2042 = vrcp.pop %v1978
        %v2043 = vrcp.pop %v1979
        %v2044 = vrcp.pop %v1980
        %v2045 = vrcp.pop %v1981
        %v2046 = vrcp.pop %v1982
        %v2047 = vrcp.pop %v1983
        %v2048 = vrcp.pop %v1984
        %v2049 = vrcp.pop %v1985
        %v2050 = vrcp.pop %v1986
        %v2051 = vrcp.pop %v1987
        %v2052 = vrcp.pop %v1988
        %v2053 = vrcp.pop %v1989
        %v2054 = vrcp.pop %v1990
        %v2055 = vrcp.pop %v1991
        %v2056 = vrcp.pop %v1992
        %v2057 = vrcp.pop %v1993
        %v2058 = vrcp.pop %v1994
        %v2059 = vrcp.pop %v1995
        %v2060 = vrcp.pop %v1996
        %v2061 = vrcp.pop %v1997
        %v2062 = vrcp.pop %v1998
        %v2063 = vrcp.pop %v1999
        %v2064 = vrcp.pop %v2000
        %v2065 = vrcp.pop %v2001
        %v2066 = vrcp.pop %v2002
        %v2067 = vrcp.pop %v2003
        %v2068 = vrcp.pop %v2004
        %v2069 = vrcp.pop %v2005
        %v2070 = vrcp.pop %v2006
        %v2071 = vrcp.pop %v2007
        %v2072 = vrcp.pop %v2008
        %v2073 = vrcp.pop %v2009
        %v2074 = vrcp.pop %v2010
        %v2075 = vrcp.pop %v2011
        %v2076 = vrcp.pop %v2012
        %v2077 = vrcp.pop %v2013
        %v2078 = vrcp.pop %v2014
        %v2079 = vrcp.pop %v2015
        %v2080 = vrcp.pop %v2016
        %v2081 = vrcp.pop %v2017
        %v2082 = vrcp.pop %v2018
        %v2083 = vrcp.pop %v2019
        %v2084 = vrcp.pop %v2020
        %v2085 = vrcp.pop %v2021
        %2086 = vst [vmem:[%s348] sm:$0xff] %v2022
        %2087 = vst [vmem:[%s348 + $0x8] sm:$0xff] %v2023
        %2088 = vst [vmem:[%s348 + $0x10] sm:$0xff] %v2024
        %2089 = vst [vmem:[%s348 + $0x18] sm:$0xff] %v2025
        %2090 = vst [vmem:[%s348 + $0x20] sm:$0xff] %v2026
        %2091 = vst [vmem:[%s348 + $0x28] sm:$0xff] %v2027
        %2092 = vst [vmem:[%s348 + $0x30] sm:$0xff] %v2028
        %2093 = vst [vmem:[%s348 + $0x38] sm:$0xff] %v2029
        %2094 = vst [vmem:[%s348 + $0x40] sm:$0xff] %v2030
        %2095 = vst [vmem:[%s348 + $0x48] sm:$0xff] %v2031
        %2096 = vst [vmem:[%s348 + $0x50] sm:$0xff] %v2032
        %2097 = vst [vmem:[%s348 + $0x58] sm:$0xff] %v2033
        %2098 = vst [vmem:[%s348 + $0x60] sm:$0xff] %v2034
        %2099 = vst [vmem:[%s348 + $0x68] sm:$0xff] %v2035
        %2100 = vst [vmem:[%s348 + $0x70] sm:$0xff] %v2036
        %2101 = vst [vmem:[%s348 + $0x78] sm:$0xff] %v2037
        %2102 = vst [vmem:[%s348 + $0x80] sm:$0xff] %v2038
        %2103 = vst [vmem:[%s348 + $0x88] sm:$0xff] %v2039
        %2104 = vst [vmem:[%s348 + $0x90] sm:$0xff] %v2040
        %2105 = vst [vmem:[%s348 + $0x98] sm:$0xff] %v2041
        %2106 = vst [vmem:[%s348 + $0xa0] sm:$0xff] %v2042
        %2107 = vst [vmem:[%s348 + $0xa8] sm:$0xff] %v2043
        %2108 = vst [vmem:[%s348 + $0xb0] sm:$0xff] %v2044
        %2109 = vst [vmem:[%s348 + $0xb8] sm:$0xff] %v2045
        %2110 = vst [vmem:[%s348 + $0xc0] sm:$0xff] %v2046
        %2111 = vst [vmem:[%s348 + $0xc8] sm:$0xff] %v2047
        %2112 = vst [vmem:[%s348 + $0xd0] sm:$0xff] %v2048
        %2113 = vst [vmem:[%s348 + $0xd8] sm:$0xff] %v2049
        %2114 = vst [vmem:[%s348 + $0xe0] sm:$0xff] %v2050
        %2115 = vst [vmem:[%s348 + $0xe8] sm:$0xff] %v2051
        %2116 = vst [vmem:[%s348 + $0xf0] sm:$0xff] %v2052
        %2117 = vst [vmem:[%s348 + $0xf8] sm:$0xff] %v2053
        %2118 = vst [vmem:[%s348 + $0x100] sm:$0xff] %v2054
        %2119 = vst [vmem:[%s348 + $0x108] sm:$0xff] %v2055
        %2120 = vst [vmem:[%s348 + $0x110] sm:$0xff] %v2056
        %2121 = vst [vmem:[%s348 + $0x118] sm:$0xff] %v2057
        %2122 = vst [vmem:[%s348 + $0x120] sm:$0xff] %v2058
        %2123 = vst [vmem:[%s348 + $0x128] sm:$0xff] %v2059
        %2124 = vst [vmem:[%s348 + $0x130] sm:$0xff] %v2060
        %2125 = vst [vmem:[%s348 + $0x138] sm:$0xff] %v2061
        %2126 = vst [vmem:[%s348 + $0x140] sm:$0xff] %v2062
        %2127 = vst [vmem:[%s348 + $0x148] sm:$0xff] %v2063
        %2128 = vst [vmem:[%s348 + $0x150] sm:$0xff] %v2064
        %2129 = vst [vmem:[%s348 + $0x158] sm:$0xff] %v2065
        %2130 = vst [vmem:[%s348 + $0x160] sm:$0xff] %v2066
        %2131 = vst [vmem:[%s348 + $0x168] sm:$0xff] %v2067
        %2132 = vst [vmem:[%s348 + $0x170] sm:$0xff] %v2068
        %2133 = vst [vmem:[%s348 + $0x178] sm:$0xff] %v2069
        %2134 = vst [vmem:[%s348 + $0x180] sm:$0xff] %v2070
        %2135 = vst [vmem:[%s348 + $0x188] sm:$0xff] %v2071
        %2136 = vst [vmem:[%s348 + $0x190] sm:$0xff] %v2072
        %2137 = vst [vmem:[%s348 + $0x198] sm:$0xff] %v2073
        %2138 = vst [vmem:[%s348 + $0x1a0] sm:$0xff] %v2074
        %2139 = vst [vmem:[%s348 + $0x1a8] sm:$0xff] %v2075
        %2140 = vst [vmem:[%s348 + $0x1b0] sm:$0xff] %v2076
        %2141 = vst [vmem:[%s348 + $0x1b8] sm:$0xff] %v2077
        %2142 = vst [vmem:[%s348 + $0x1c0] sm:$0xff] %v2078
        %2143 = vst [vmem:[%s348 + $0x1c8] sm:$0xff] %v2079
        %2144 = vst [vmem:[%s348 + $0x1d0] sm:$0xff] %v2080
        %2145 = vst [vmem:[%s348 + $0x1d8] sm:$0xff] %v2081
        %2146 = vst [vmem:[%s348 + $0x1e0] sm:$0xff] %v2082
        %2147 = vst [vmem:[%s348 + $0x1e8] sm:$0xff] %v2083
        %2148 = vst [vmem:[%s348 + $0x1f0] sm:$0xff] %v2084
        %2149 = vst [vmem:[%s348 + $0x1f8] sm:$0xff] %v2085
        %s2150 = sand.u32 %s186, 1
        %s2151 = scalar_lea.sflag [#allocation4], %s2150
        %s2152 = sand.u32 %s186, 1
        %s2153 = smul.addr %s2152, 512
        %s2154 = scalar_lea.vmem [#allocation10], %s2153
        // Predicated region
        $region65: #{tpu_custom_call.1} parent=47 // pred_check
          %p2155 = pneg %p196
        $region66: #{tpu_custom_call.1} parent=47 // pred_check_branch
          %2157 = sbr.rel (%p2155) target = $region68
        $region67: #{tpu_custom_call.1} parent=47 // pred_region
          %s2158 = smul.u32 64, %s26
          %2160 = vsyncadd %s2151, 0
          %s2161 = smul.addr %s2158, 8
          %s2162 = scalar_lea.hbm %s7, %s2161
          %s2163 = sshll.u32 %s2154, 4
          %s2164 = int_to_ptr.vmem [resolvable:$true] %s2163
          %s2165 = sshll.u32 %s2162, 4
          %s2166 = int_to_ptr.hbm [resolvable:$true] %s2165
          %2171 = dma.vmem_to_hbm [thread:$0]  %s2164, 8192, %s2166, %s2151, 128, 128, 8
        $region68: #{tpu_custom_call.1} parent=47 // pred_fallthru
          _
      $region48: #{tpu_custom_call.1} parent=5 // pred_fallthru
        _
      %p2172 = scmp.le.s32.totalorder 2, %s21
      // Predicated region
      $region69: #{tpu_custom_call.1} parent=5 // pred_check
        %p2173 = pneg %p2172
      $region70: #{tpu_custom_call.1} parent=5 // pred_check_branch
        %2175 = sbr.rel (%p2173) target = $region72
      $region71: #{tpu_custom_call.1} parent=5 // pred_region
        %s2176 = ssub.s32 %s21, 2
        // Predicated region
        $region73: #{tpu_custom_call.1} parent=71 // pred_check
          %p2177 = pneg %p202
        $region74: #{tpu_custom_call.1} parent=71 // pred_check_branch
          %2179 = sbr.rel (%p2177) target = $region76
        $region75: #{tpu_custom_call.1} parent=71 // pred_region
          %s2180 = sand.u32 %s187, 1
          %s2181 = scalar_lea.sflag [#allocation4], %s2180
          %s2182 = sand.u32 %s187, 1
          %s2183 = smul.addr %s2182, 512
          %s2184 = scalar_lea.vmem [#allocation10], %s2183
          %2186 = dma.done %s2181, 8192
        $region76: #{tpu_custom_call.1} parent=71 // pred_fallthru
          _
      $region72: #{tpu_custom_call.1} parent=5 // pred_fallthru
        _
    $region6: #{tpu_custom_call.1} parent=1 // loop_footer
      %s25 = sadd.s32 1, %s21
    $region7: #{tpu_custom_call.1} parent=1 // loop_footer_branch
      %20 = sbr.rel target = $region3
    $region8: #{tpu_custom_call.1} parent=1 // loop_exit
      _
    %2187 = vsyncpa [#allocation3], 1
    %s2188 = scalar_lea.sflag [#allocation3], 1
    %2189 = vsyncpa %s2188, 1
    %2190 = vsyncpa [#allocation6], 1
    %2191 = vsyncpa [#allocation9], 1
    %2192 = vsyncpa [#allocation4], 1
    %s2193 = scalar_lea.sflag [#allocation4], 1
    %2194 = vsyncpa %s2193, 1

</llo_original>
